<compile_context>
chip_gen: v6e
topology: v6e:2x2x1
jax: 0.10.0
libtpu: 0.0.40
codegen_flags: <defaults>
</compile_context>

<pallas_src>
import functools

import jax
import jax.numpy as jnp
from jax.experimental import pallas as pl
from jax.experimental.pallas import tpu as pltpu


def _round_up(x, m):
    return ((x + m - 1) // m) * m


def _vmem():
    return pl.BlockSpec(memory_space=pltpu.MemorySpace.VMEM)


# --------------------------------------------------------------------------
# Pallas kernels
# --------------------------------------------------------------------------
def _rnn_layer_kernel(x_ref, w_ih_ref, w_hh_ref, b_ref,
                      out_ref, hfin_ref, h_scratch, pre_scratch):
    """One RNN layer over the whole sequence (time-major, flattened layout).

    x_ref:       (S*B, I)  input sequence; rows [t*B, (t+1)*B) belong to timestep t
    w_ih_ref:    (I, H)    input->hidden weight, pre-transposed & zero-padded
    w_hh_ref:    (H, H)    hidden->hidden weight, pre-transposed & zero-padded
    b_ref:       (1, H)    combined bias (b_ih + b_hh), zero-padded
    out_ref:     (S*B, H)  all hidden states
    hfin_ref:    (B, H)    final hidden state
    h_scratch:   (B, H)    f32 recurrent carry
    pre_scratch: (S*B, H)  f32 hoisted  x @ W_ih + bias
    """
    SB, _ = x_ref.shape
    B = h_scratch.shape[0]          # padded batch (multiple of 8)
    S = SB // B                     # static

    # Hoisted: input contribution of EVERY timestep in one big MXU matmul.
    pre_scratch[...] = (
        jnp.dot(x_ref[...], w_ih_ref[...], preferred_element_type=jnp.float32)
        + b_ref[...])

    h_scratch[...] = jnp.zeros_like(h_scratch)

    def step(t, carry):
        off = pl.multiple_of(t * B, 8)                    # B is a multiple of 8
        pre_t = pre_scratch[pl.ds(off, B), :]
        h_new = jnp.tanh(
            pre_t + jnp.dot(h_scratch[...], w_hh_ref[...],
                            preferred_element_type=jnp.float32))
        h_scratch[...] = h_new
        out_ref[pl.ds(off, B), :] = h_new.astype(out_ref.dtype)
        return carry

    jax.lax.fori_loop(0, S, step, 0, unroll=(S <= 64))
    hfin_ref[...] = h_scratch[...].astype(hfin_ref.dtype)


def _linear_kernel(x_ref, w_ref, b_ref, o_ref):
    """o = x @ w + b for one row tile.  x:(tm,H) w:(H,O) b:(1,O) o:(tm,O)"""
    o_ref[...] = (jnp.dot(x_ref[...], w_ref[...],
                          preferred_element_type=jnp.float32)
                  + b_ref[...]).astype(o_ref.dtype)


# --------------------------------------------------------------------------
# pallas_call wrappers
# --------------------------------------------------------------------------
def _rnn_layer(x_flat, w_ih_t, w_hh_t, bias, b_pad):
    """x_flat:(S*B_pad, I_pad) -> (out (S*B_pad, H_pad), h_fin (B_pad, H_pad))."""
    SB, _ = x_flat.shape
    H = w_hh_t.shape[0]
    out, h_fin = pl.pallas_call(
        _rnn_layer_kernel,
        out_shape=(jax.ShapeDtypeStruct((SB, H), jnp.float32),
                   jax.ShapeDtypeStruct((b_pad, H), jnp.float32)),
        in_specs=[_vmem()] * 4,
        out_specs=(_vmem(), _vmem()),
        scratch_shapes=[pltpu.VMEM((b_pad, H), jnp.float32),
                        pltpu.VMEM((SB, H), jnp.float32)],
    )(x_flat, w_ih_t, w_hh_t, bias)
    # TODO(synk): for long sequences / large hidden dims, chunk the sequence with a grid
    # and streaming BlockSpecs (or manual double-buffered DMA) so x/out/pre are not fully
    # VMEM-resident — mandatory on v7x (64 MiB VMEM).
    return out, h_fin


def _pick_tm(m):
    for tm in (512, 256, 128, 64, 32, 16, 8):
        if m % tm == 0:
            return tm
    return m


def _linear(x2d, w_t, bias):
    """Row-tiled, pipelined x @ w + b.  x:(M,H) w:(H,O) b:(1,O) -> (M,O)."""
    M, H = x2d.shape
    O = w_t.shape[1]
    tm = _pick_tm(M)
    return pl.pallas_call(
        _linear_kernel,
        out_shape=jax.ShapeDtypeStruct((M, O), jnp.float32),
        grid_spec=pltpu.PrefetchScalarGridSpec(
            num_scalar_prefetch=0,
            grid=(M // tm,),
            in_specs=[pl.BlockSpec((tm, H), lambda i: (i, 0)),
                      pl.BlockSpec((H, O), lambda i: (0, 0)),
                      pl.BlockSpec((1, O), lambda i: (0, 0))],
            out_specs=pl.BlockSpec((tm, O), lambda i: (i, 0))),
        compiler_params=pltpu.CompilerParams(
            dimension_semantics=("parallel",)),
    )(x2d, w_t, bias)


# --------------------------------------------------------------------------
# One-time parameter preparation (transpose + combine bias + pad to (8,128) tiles)
# --------------------------------------------------------------------------
def prepare_params(params, input_size, hidden_dim, output_size):
    I_pad = _round_up(input_size, 128)
    H_pad = _round_up(hidden_dim, 128)
    O_pad = _round_up(output_size, 128)

    rnn_prepped = []
    for li, (w_ih, w_hh, b_ih, b_hh) in enumerate(params["rnn"]):
        in_dim = w_ih.shape[1]
        in_pad = I_pad if li == 0 else H_pad
        w_ih_t = jnp.zeros((in_pad, H_pad), jnp.float32
                           ).at[:in_dim, :hidden_dim].set(jnp.transpose(w_ih))
        w_hh_t = jnp.zeros((H_pad, H_pad), jnp.float32
                           ).at[:hidden_dim, :hidden_dim].set(jnp.transpose(w_hh))
        bias = jnp.zeros((1, H_pad), jnp.float32
                         ).at[0, :hidden_dim].set(b_ih + b_hh)
        rnn_prepped.append((w_ih_t, w_hh_t, bias))

    w_fc, b_fc = params["fc"]
    w_fc_t = jnp.zeros((H_pad, O_pad), jnp.float32
                       ).at[:hidden_dim, :output_size].set(jnp.transpose(w_fc))
    b_fc_p = jnp.zeros((1, O_pad), jnp.float32).at[0, :output_size].set(b_fc)

    return {"rnn": tuple(rnn_prepped), "fc": (w_fc_t, b_fc_p)}


# --------------------------------------------------------------------------
# Forward pass
# --------------------------------------------------------------------------
@functools.partial(jax.jit, static_argnames=("dims",))
def rnn_forward(x_bsi, prepared, dims):
    """x_bsi: (B, S, input_size) -> (out (B,S,output_size), hidden (n_layers,B,hidden))."""
    input_size, hidden_dim, output_size = dims
    B, S, I = x_bsi.shape
    B_pad = _round_up(B, 8)
    I_pad = prepared["rnn"][0][0].shape[0]
    H_pad = prepared["rnn"][0][1].shape[0]

    # (B,S,I) -> time-major, padded, flattened (S*B_pad, I_pad)
    x = jnp.transpose(x_bsi, (1, 0, 2)).astype(jnp.float32)
    x = jnp.pad(x, ((0, 0), (0, B_pad - B), (0, I_pad - I)))
    layer_in = x.reshape(S * B_pad, I_pad)

    hiddens = []
    for (w_ih_t, w_hh_t, bias) in prepared["rnn"]:
        layer_out, h_fin = _rnn_layer(layer_in, w_ih_t, w_hh_t, bias, B_pad)
        hiddens.append(h_fin[:B, :hidden_dim])
        layer_in = layer_out                       # (S*B_pad, H_pad)

    hidden = jnp.stack(hiddens, axis=0)            # (n_layers, B, H)

    w_fc_t, b_fc_p = prepared["fc"]
    O_pad = w_fc_t.shape[1]
    y = _linear(layer_in, w_fc_t, b_fc_p)          # (S*B_pad, O_pad)
    y = y.reshape(S, B_pad, O_pad)[:, :B, :output_size]
    y = jnp.transpose(y, (1, 0, 2))                # (B, S, output_size)
    return y, hidden


# --------------------------------------------------------------------------
# Deterministic parameter init (PyTorch-style U(-1/sqrt(H), 1/sqrt(H)))
# --------------------------------------------------------------------------
def init_params(key, input_size, output_size, hidden_dim, n_layers):
    bound = 1.0 / jnp.sqrt(jnp.float32(hidden_dim))
    params = {"rnn": []}
    for layer in range(n_layers):
        in_dim = input_size if layer == 0 else hidden_dim
        key, k1, k2, k3, k4 = jax.random.split(key, 5)
        w_ih = jax.random.uniform(k1, (hidden_dim, in_dim), jnp.float32, -bound, bound)
        w_hh = jax.random.uniform(k2, (hidden_dim, hidden_dim), jnp.float32, -bound, bound)
        b_ih = jax.random.uniform(k3, (hidden_dim,), jnp.float32, -bound, bound)
        b_hh = jax.random.uniform(k4, (hidden_dim,), jnp.float32, -bound, bound)
        params["rnn"].append((w_ih, w_hh, b_ih, b_hh))
    key, k1, k2 = jax.random.split(key, 3)
    w_fc = jax.random.uniform(k1, (output_size, hidden_dim), jnp.float32, -bound, bound)
    b_fc = jax.random.uniform(k2, (output_size,), jnp.float32, -bound, bound)
    params["fc"] = (w_fc, b_fc)
    return params


# --------------------------------------------------------------------------
# Pure-JAX reference (correctness check only)
# --------------------------------------------------------------------------
def rnn_forward_ref(x_bsi, params):
    B, S, _ = x_bsi.shape
    layer_in = x_bsi
    hiddens = []
    for (w_ih, w_hh, b_ih, b_hh) in params["rnn"]:
        H = w_ih.shape[0]
        h = jnp.zeros((B, H), jnp.float32)
        outs = []
        for t in range(S):
            h = jnp.tanh(layer_in[:, t, :] @ w_ih.T + b_ih + h @ w_hh.T + b_hh)
            outs.append(h)
        layer_in = jnp.stack(outs, axis=1)
        hiddens.append(h)
    w_fc, b_fc = params["fc"]
    out = layer_in @ w_fc.T + b_fc
    return out, jnp.stack(hiddens, axis=0)


# --------------------------------------------------------------------------
if __name__ == "__main__":
    batch, seq, input_size, hidden_dim, output_size, n_layers = 2, 8, 16, 32, 4, 2

    key = jax.random.PRNGKey(0)
    key, kx = jax.random.split(key)
    x = jax.random.normal(kx, (batch, seq, input_size), jnp.float32)

    params = init_params(key, input_size, output_size, hidden_dim, n_layers)
    prepared = prepare_params(params, input_size, hidden_dim, output_size)

    out, hidden = rnn_forward(x, prepared, (input_size, hidden_dim, output_size))
    out = jax.block_until_ready(out)
    hidden = jax.block_until_ready(hidden)

    out_ref, hidden_ref = rnn_forward_ref(x, params)
    assert out.shape == (batch, seq, output_size), out.shape
    assert hidden.shape == (n_layers, batch, hidden_dim), hidden.shape
    assert jnp.allclose(out, out_ref, atol=1e-4, rtol=1e-4)
    assert jnp.allclose(hidden, hidden_ref, atol=1e-4, rtol=1e-4)

    print("KERNEL_OK")
</pallas_src>

<mosaic_0001>
module attributes {stable_mosaic.version = 11 : i64} {
  func.func @_rnn_layer_kernel(%arg0: memref<64x128xf32, #tpu.memory_space<vmem>>, %arg1: memref<128x128xf32, #tpu.memory_space<vmem>>, %arg2: memref<128x128xf32, #tpu.memory_space<vmem>>, %arg3: memref<1x128xf32, #tpu.memory_space<vmem>>, %arg4: memref<64x128xf32, #tpu.memory_space<vmem>>, %arg5: memref<8x128xf32, #tpu.memory_space<vmem>>, %arg6: memref<8x128xf32, #tpu.memory_space<vmem>>, %arg7: memref<64x128xf32, #tpu.memory_space<vmem>>) attributes {dimension_semantics = [], scalar_prefetch = 0 : i64, scratch_operands = 2 : i64, tpu.core_type = #tpu.core_type<tc>} {
    %c0 = arith.constant 0 : index
    %c0_0 = arith.constant 0 : index
    %0 = vector.load %arg0[%c0, %c0_0] : memref<64x128xf32, #tpu.memory_space<vmem>>, vector<64x128xf32>
    %c0_1 = arith.constant 0 : index
    %c0_2 = arith.constant 0 : index
    %1 = vector.load %arg1[%c0_1, %c0_2] : memref<128x128xf32, #tpu.memory_space<vmem>>, vector<128x128xf32>
    %cst = arith.constant dense<0.000000e+00> : vector<64x128xf32>
    %2 = tpu.matmul %0, %1, %cst {dimension_numbers = #tpu.dot_dimension_numbers<[1], [0], [0], [1], [0, 0, 1, 1], [], []>} : vector<64x128xf32>, vector<128x128xf32>, vector<64x128xf32> -> vector<64x128xf32>
    %c0_3 = arith.constant 0 : index
    %c0_4 = arith.constant 0 : index
    %3 = vector.load %arg3[%c0_3, %c0_4] : memref<1x128xf32, #tpu.memory_space<vmem>>, vector<1x128xf32>
    %4 = vector.broadcast %3 : vector<1x128xf32> to vector<64x128xf32>
    %5 = arith.addf %2, %4 : vector<64x128xf32>
    %c0_5 = arith.constant 0 : index
    %c0_6 = arith.constant 0 : index
    %6 = vector.load %arg7[%c0_5, %c0_6] : memref<64x128xf32, #tpu.memory_space<vmem>>, vector<64x128xf32>
    tpu.vector_store %arg7[%c0_5, %c0_6], %5 {strides = array<i32>} : memref<64x128xf32, #tpu.memory_space<vmem>>, vector<64x128xf32>,
    %cst_7 = arith.constant 0.000000e+00 : f32
    %7 = vector.broadcast %cst_7 : f32 to vector<8x128xf32>
    %c0_8 = arith.constant 0 : index
    %c0_9 = arith.constant 0 : index
    %8 = vector.load %arg6[%c0_8, %c0_9] : memref<8x128xf32, #tpu.memory_space<vmem>>, vector<8x128xf32>
    tpu.vector_store %arg6[%c0_8, %c0_9], %7 {strides = array<i32>} : memref<8x128xf32, #tpu.memory_space<vmem>>, vector<8x128xf32>,
    %c0_i32 = arith.constant 0 : i32
    %c8_i32 = arith.constant 8 : i32
    %9 = arith.muli %c0_i32, %c8_i32 : i32
    %10 = tpu.assume_multiple %9, 8 : i32
    %11 = arith.index_cast %10 : i32 to index
    %c0_10 = arith.constant 0 : index
    %12 = vector.load %arg7[%11, %c0_10] : memref<64x128xf32, #tpu.memory_space<vmem>>, vector<8x128xf32>
    %c0_11 = arith.constant 0 : index
    %c0_12 = arith.constant 0 : index
    %13 = vector.load %arg6[%c0_11, %c0_12] : memref<8x128xf32, #tpu.memory_space<vmem>>, vector<8x128xf32>
    %c0_13 = arith.constant 0 : index
    %c0_14 = arith.constant 0 : index
    %14 = vector.load %arg2[%c0_13, %c0_14] : memref<128x128xf32, #tpu.memory_space<vmem>>, vector<128x128xf32>
    %cst_15 = arith.constant dense<0.000000e+00> : vector<8x128xf32>
    %15 = tpu.matmul %13, %14, %cst_15 {dimension_numbers = #tpu.dot_dimension_numbers<[1], [0], [0], [1], [0, 0, 1, 1], [], []>} : vector<8x128xf32>, vector<128x128xf32>, vector<8x128xf32> -> vector<8x128xf32>
    %16 = arith.addf %12, %15 : vector<8x128xf32>
    %17 = math.tanh %16 : vector<8x128xf32>
    %c0_16 = arith.constant 0 : index
    %c0_17 = arith.constant 0 : index
    %18 = vector.load %arg6[%c0_16, %c0_17] : memref<8x128xf32, #tpu.memory_space<vmem>>, vector<8x128xf32>
    tpu.vector_store %arg6[%c0_16, %c0_17], %17 {strides = array<i32>} : memref<8x128xf32, #tpu.memory_space<vmem>>, vector<8x128xf32>,
    %19 = arith.index_cast %10 : i32 to index
    %c0_18 = arith.constant 0 : index
    %20 = vector.load %arg4[%19, %c0_18] : memref<64x128xf32, #tpu.memory_space<vmem>>, vector<8x128xf32>
    tpu.vector_store %arg4[%19, %c0_18], %17 {strides = array<i32>} : memref<64x128xf32, #tpu.memory_space<vmem>>, vector<8x128xf32>,
    %c1_i32 = arith.constant 1 : i32
    %c8_i32_19 = arith.constant 8 : i32
    %21 = arith.muli %c1_i32, %c8_i32_19 : i32
    %22 = tpu.assume_multiple %21, 8 : i32
    %23 = arith.index_cast %22 : i32 to index
    %c0_20 = arith.constant 0 : index
    %24 = vector.load %arg7[%23, %c0_20] : memref<64x128xf32, #tpu.memory_space<vmem>>, vector<8x128xf32>
    %c0_21 = arith.constant 0 : index
    %c0_22 = arith.constant 0 : index
    %25 = vector.load %arg6[%c0_21, %c0_22] : memref<8x128xf32, #tpu.memory_space<vmem>>, vector<8x128xf32>
    %c0_23 = arith.constant 0 : index
    %c0_24 = arith.constant 0 : index
    %26 = vector.load %arg2[%c0_23, %c0_24] : memref<128x128xf32, #tpu.memory_space<vmem>>, vector<128x128xf32>
    %cst_25 = arith.constant dense<0.000000e+00> : vector<8x128xf32>
    %27 = tpu.matmul %25, %26, %cst_25 {dimension_numbers = #tpu.dot_dimension_numbers<[1], [0], [0], [1], [0, 0, 1, 1], [], []>} : vector<8x128xf32>, vector<128x128xf32>, vector<8x128xf32> -> vector<8x128xf32>
    %28 = arith.addf %24, %27 : vector<8x128xf32>
    %29 = math.tanh %28 : vector<8x128xf32>
    %c0_26 = arith.constant 0 : index
    %c0_27 = arith.constant 0 : index
    %30 = vector.load %arg6[%c0_26, %c0_27] : memref<8x128xf32, #tpu.memory_space<vmem>>, vector<8x128xf32>
    tpu.vector_store %arg6[%c0_26, %c0_27], %29 {strides = array<i32>} : memref<8x128xf32, #tpu.memory_space<vmem>>, vector<8x128xf32>,
    %31 = arith.index_cast %22 : i32 to index
    %c0_28 = arith.constant 0 : index
    %32 = vector.load %arg4[%31, %c0_28] : memref<64x128xf32, #tpu.memory_space<vmem>>, vector<8x128xf32>
    tpu.vector_store %arg4[%31, %c0_28], %29 {strides = array<i32>} : memref<64x128xf32, #tpu.memory_space<vmem>>, vector<8x128xf32>,
    %c2_i32 = arith.constant 2 : i32
    %c8_i32_29 = arith.constant 8 : i32
    %33 = arith.muli %c2_i32, %c8_i32_29 : i32
    %34 = tpu.assume_multiple %33, 8 : i32
    %35 = arith.index_cast %34 : i32 to index
    %c0_30 = arith.constant 0 : index
    %36 = vector.load %arg7[%35, %c0_30] : memref<64x128xf32, #tpu.memory_space<vmem>>, vector<8x128xf32>
    %c0_31 = arith.constant 0 : index
    %c0_32 = arith.constant 0 : index
    %37 = vector.load %arg6[%c0_31, %c0_32] : memref<8x128xf32, #tpu.memory_space<vmem>>, vector<8x128xf32>
    %c0_33 = arith.constant 0 : index
    %c0_34 = arith.constant 0 : index
    %38 = vector.load %arg2[%c0_33, %c0_34] : memref<128x128xf32, #tpu.memory_space<vmem>>, vector<128x128xf32>
    %cst_35 = arith.constant dense<0.000000e+00> : vector<8x128xf32>
    %39 = tpu.matmul %37, %38, %cst_35 {dimension_numbers = #tpu.dot_dimension_numbers<[1], [0], [0], [1], [0, 0, 1, 1], [], []>} : vector<8x128xf32>, vector<128x128xf32>, vector<8x128xf32> -> vector<8x128xf32>
    %40 = arith.addf %36, %39 : vector<8x128xf32>
    %41 = math.tanh %40 : vector<8x128xf32>
    %c0_36 = arith.constant 0 : index
    %c0_37 = arith.constant 0 : index
    %42 = vector.load %arg6[%c0_36, %c0_37] : memref<8x128xf32, #tpu.memory_space<vmem>>, vector<8x128xf32>
    tpu.vector_store %arg6[%c0_36, %c0_37], %41 {strides = array<i32>} : memref<8x128xf32, #tpu.memory_space<vmem>>, vector<8x128xf32>,
    %43 = arith.index_cast %34 : i32 to index
    %c0_38 = arith.constant 0 : index
    %44 = vector.load %arg4[%43, %c0_38] : memref<64x128xf32, #tpu.memory_space<vmem>>, vector<8x128xf32>
    tpu.vector_store %arg4[%43, %c0_38], %41 {strides = array<i32>} : memref<64x128xf32, #tpu.memory_space<vmem>>, vector<8x128xf32>,
    %c3_i32 = arith.constant 3 : i32
    %c8_i32_39 = arith.constant 8 : i32
    %45 = arith.muli %c3_i32, %c8_i32_39 : i32
    %46 = tpu.assume_multiple %45, 8 : i32
    %47 = arith.index_cast %46 : i32 to index
    %c0_40 = arith.constant 0 : index
    %48 = vector.load %arg7[%47, %c0_40] : memref<64x128xf32, #tpu.memory_space<vmem>>, vector<8x128xf32>
    %c0_41 = arith.constant 0 : index
    %c0_42 = arith.constant 0 : index
    %49 = vector.load %arg6[%c0_41, %c0_42] : memref<8x128xf32, #tpu.memory_space<vmem>>, vector<8x128xf32>
    %c0_43 = arith.constant 0 : index
    %c0_44 = arith.constant 0 : index
    %50 = vector.load %arg2[%c0_43, %c0_44] : memref<128x128xf32, #tpu.memory_space<vmem>>, vector<128x128xf32>
    %cst_45 = arith.constant dense<0.000000e+00> : vector<8x128xf32>
    %51 = tpu.matmul %49, %50, %cst_45 {dimension_numbers = #tpu.dot_dimension_numbers<[1], [0], [0], [1], [0, 0, 1, 1], [], []>} : vector<8x128xf32>, vector<128x128xf32>, vector<8x128xf32> -> vector<8x128xf32>
    %52 = arith.addf %48, %51 : vector<8x128xf32>
    %53 = math.tanh %52 : vector<8x128xf32>
    %c0_46 = arith.constant 0 : index
    %c0_47 = arith.constant 0 : index
    %54 = vector.load %arg6[%c0_46, %c0_47] : memref<8x128xf32, #tpu.memory_space<vmem>>, vector<8x128xf32>
    tpu.vector_store %arg6[%c0_46, %c0_47], %53 {strides = array<i32>} : memref<8x128xf32, #tpu.memory_space<vmem>>, vector<8x128xf32>,
    %55 = arith.index_cast %46 : i32 to index
    %c0_48 = arith.constant 0 : index
    %56 = vector.load %arg4[%55, %c0_48] : memref<64x128xf32, #tpu.memory_space<vmem>>, vector<8x128xf32>
    tpu.vector_store %arg4[%55, %c0_48], %53 {strides = array<i32>} : memref<64x128xf32, #tpu.memory_space<vmem>>, vector<8x128xf32>,
    %c4_i32 = arith.constant 4 : i32
    %c8_i32_49 = arith.constant 8 : i32
    %57 = arith.muli %c4_i32, %c8_i32_49 : i32
    %58 = tpu.assume_multiple %57, 8 : i32
    %59 = arith.index_cast %58 : i32 to index
    %c0_50 = arith.constant 0 : index
    %60 = vector.load %arg7[%59, %c0_50] : memref<64x128xf32, #tpu.memory_space<vmem>>, vector<8x128xf32>
    %c0_51 = arith.constant 0 : index
    %c0_52 = arith.constant 0 : index
    %61 = vector.load %arg6[%c0_51, %c0_52] : memref<8x128xf32, #tpu.memory_space<vmem>>, vector<8x128xf32>
    %c0_53 = arith.constant 0 : index
    %c0_54 = arith.constant 0 : index
    %62 = vector.load %arg2[%c0_53, %c0_54] : memref<128x128xf32, #tpu.memory_space<vmem>>, vector<128x128xf32>
    %cst_55 = arith.constant dense<0.000000e+00> : vector<8x128xf32>
    %63 = tpu.matmul %61, %62, %cst_55 {dimension_numbers = #tpu.dot_dimension_numbers<[1], [0], [0], [1], [0, 0, 1, 1], [], []>} : vector<8x128xf32>, vector<128x128xf32>, vector<8x128xf32> -> vector<8x128xf32>
    %64 = arith.addf %60, %63 : vector<8x128xf32>
    %65 = math.tanh %64 : vector<8x128xf32>
    %c0_56 = arith.constant 0 : index
    %c0_57 = arith.constant 0 : index
    %66 = vector.load %arg6[%c0_56, %c0_57] : memref<8x128xf32, #tpu.memory_space<vmem>>, vector<8x128xf32>
    tpu.vector_store %arg6[%c0_56, %c0_57], %65 {strides = array<i32>} : memref<8x128xf32, #tpu.memory_space<vmem>>, vector<8x128xf32>,
    %67 = arith.index_cast %58 : i32 to index
    %c0_58 = arith.constant 0 : index
    %68 = vector.load %arg4[%67, %c0_58] : memref<64x128xf32, #tpu.memory_space<vmem>>, vector<8x128xf32>
    tpu.vector_store %arg4[%67, %c0_58], %65 {strides = array<i32>} : memref<64x128xf32, #tpu.memory_space<vmem>>, vector<8x128xf32>,
    %c5_i32 = arith.constant 5 : i32
    %c8_i32_59 = arith.constant 8 : i32
    %69 = arith.muli %c5_i32, %c8_i32_59 : i32
    %70 = tpu.assume_multiple %69, 8 : i32
    %71 = arith.index_cast %70 : i32 to index
    %c0_60 = arith.constant 0 : index
    %72 = vector.load %arg7[%71, %c0_60] : memref<64x128xf32, #tpu.memory_space<vmem>>, vector<8x128xf32>
    %c0_61 = arith.constant 0 : index
    %c0_62 = arith.constant 0 : index
    %73 = vector.load %arg6[%c0_61, %c0_62] : memref<8x128xf32, #tpu.memory_space<vmem>>, vector<8x128xf32>
    %c0_63 = arith.constant 0 : index
    %c0_64 = arith.constant 0 : index
    %74 = vector.load %arg2[%c0_63, %c0_64] : memref<128x128xf32, #tpu.memory_space<vmem>>, vector<128x128xf32>
    %cst_65 = arith.constant dense<0.000000e+00> : vector<8x128xf32>
    %75 = tpu.matmul %73, %74, %cst_65 {dimension_numbers = #tpu.dot_dimension_numbers<[1], [0], [0], [1], [0, 0, 1, 1], [], []>} : vector<8x128xf32>, vector<128x128xf32>, vector<8x128xf32> -> vector<8x128xf32>
    %76 = arith.addf %72, %75 : vector<8x128xf32>
    %77 = math.tanh %76 : vector<8x128xf32>
    %c0_66 = arith.constant 0 : index
    %c0_67 = arith.constant 0 : index
    %78 = vector.load %arg6[%c0_66, %c0_67] : memref<8x128xf32, #tpu.memory_space<vmem>>, vector<8x128xf32>
    tpu.vector_store %arg6[%c0_66, %c0_67], %77 {strides = array<i32>} : memref<8x128xf32, #tpu.memory_space<vmem>>, vector<8x128xf32>,
    %79 = arith.index_cast %70 : i32 to index
    %c0_68 = arith.constant 0 : index
    %80 = vector.load %arg4[%79, %c0_68] : memref<64x128xf32, #tpu.memory_space<vmem>>, vector<8x128xf32>
    tpu.vector_store %arg4[%79, %c0_68], %77 {strides = array<i32>} : memref<64x128xf32, #tpu.memory_space<vmem>>, vector<8x128xf32>,
    %c6_i32 = arith.constant 6 : i32
    %c8_i32_69 = arith.constant 8 : i32
    %81 = arith.muli %c6_i32, %c8_i32_69 : i32
    %82 = tpu.assume_multiple %81, 8 : i32
    %83 = arith.index_cast %82 : i32 to index
    %c0_70 = arith.constant 0 : index
    %84 = vector.load %arg7[%83, %c0_70] : memref<64x128xf32, #tpu.memory_space<vmem>>, vector<8x128xf32>
    %c0_71 = arith.constant 0 : index
    %c0_72 = arith.constant 0 : index
    %85 = vector.load %arg6[%c0_71, %c0_72] : memref<8x128xf32, #tpu.memory_space<vmem>>, vector<8x128xf32>
    %c0_73 = arith.constant 0 : index
    %c0_74 = arith.constant 0 : index
    %86 = vector.load %arg2[%c0_73, %c0_74] : memref<128x128xf32, #tpu.memory_space<vmem>>, vector<128x128xf32>
    %cst_75 = arith.constant dense<0.000000e+00> : vector<8x128xf32>
    %87 = tpu.matmul %85, %86, %cst_75 {dimension_numbers = #tpu.dot_dimension_numbers<[1], [0], [0], [1], [0, 0, 1, 1], [], []>} : vector<8x128xf32>, vector<128x128xf32>, vector<8x128xf32> -> vector<8x128xf32>
    %88 = arith.addf %84, %87 : vector<8x128xf32>
    %89 = math.tanh %88 : vector<8x128xf32>
    %c0_76 = arith.constant 0 : index
    %c0_77 = arith.constant 0 : index
    %90 = vector.load %arg6[%c0_76, %c0_77] : memref<8x128xf32, #tpu.memory_space<vmem>>, vector<8x128xf32>
    tpu.vector_store %arg6[%c0_76, %c0_77], %89 {strides = array<i32>} : memref<8x128xf32, #tpu.memory_space<vmem>>, vector<8x128xf32>,
    %91 = arith.index_cast %82 : i32 to index
    %c0_78 = arith.constant 0 : index
    %92 = vector.load %arg4[%91, %c0_78] : memref<64x128xf32, #tpu.memory_space<vmem>>, vector<8x128xf32>
    tpu.vector_store %arg4[%91, %c0_78], %89 {strides = array<i32>} : memref<64x128xf32, #tpu.memory_space<vmem>>, vector<8x128xf32>,
    %c7_i32 = arith.constant 7 : i32
    %c8_i32_79 = arith.constant 8 : i32
    %93 = arith.muli %c7_i32, %c8_i32_79 : i32
    %94 = tpu.assume_multiple %93, 8 : i32
    %95 = arith.index_cast %94 : i32 to index
    %c0_80 = arith.constant 0 : index
    %96 = vector.load %arg7[%95, %c0_80] : memref<64x128xf32, #tpu.memory_space<vmem>>, vector<8x128xf32>
    %c0_81 = arith.constant 0 : index
    %c0_82 = arith.constant 0 : index
    %97 = vector.load %arg6[%c0_81, %c0_82] : memref<8x128xf32, #tpu.memory_space<vmem>>, vector<8x128xf32>
    %c0_83 = arith.constant 0 : index
    %c0_84 = arith.constant 0 : index
    %98 = vector.load %arg2[%c0_83, %c0_84] : memref<128x128xf32, #tpu.memory_space<vmem>>, vector<128x128xf32>
    %cst_85 = arith.constant dense<0.000000e+00> : vector<8x128xf32>
    %99 = tpu.matmul %97, %98, %cst_85 {dimension_numbers = #tpu.dot_dimension_numbers<[1], [0], [0], [1], [0, 0, 1, 1], [], []>} : vector<8x128xf32>, vector<128x128xf32>, vector<8x128xf32> -> vector<8x128xf32>
    %100 = arith.addf %96, %99 : vector<8x128xf32>
    %101 = math.tanh %100 : vector<8x128xf32>
    %c0_86 = arith.constant 0 : index
    %c0_87 = arith.constant 0 : index
    %102 = vector.load %arg6[%c0_86, %c0_87] : memref<8x128xf32, #tpu.memory_space<vmem>>, vector<8x128xf32>
    tpu.vector_store %arg6[%c0_86, %c0_87], %101 {strides = array<i32>} : memref<8x128xf32, #tpu.memory_space<vmem>>, vector<8x128xf32>,
    %103 = arith.index_cast %94 : i32 to index
    %c0_88 = arith.constant 0 : index
    %104 = vector.load %arg4[%103, %c0_88] : memref<64x128xf32, #tpu.memory_space<vmem>>, vector<8x128xf32>
    tpu.vector_store %arg4[%103, %c0_88], %101 {strides = array<i32>} : memref<64x128xf32, #tpu.memory_space<vmem>>, vector<8x128xf32>,
    %c8_i32_89 = arith.constant 8 : i32
    %c0_90 = arith.constant 0 : index
    %c0_91 = arith.constant 0 : index
    %105 = vector.load %arg6[%c0_90, %c0_91] : memref<8x128xf32, #tpu.memory_space<vmem>>, vector<8x128xf32>
    %c0_92 = arith.constant 0 : index
    %c0_93 = arith.constant 0 : index
    %106 = vector.load %arg5[%c0_92, %c0_93] : memref<8x128xf32, #tpu.memory_space<vmem>>, vector<8x128xf32>
    tpu.vector_store %arg5[%c0_92, %c0_93], %105 {strides = array<i32>} : memref<8x128xf32, #tpu.memory_space<vmem>>, vector<8x128xf32>,
    return
  }
}

module attributes {stable_mosaic.version = 11 : i64} {
  func.func @_rnn_layer_kernel(%arg0: memref<64x128xf32, #tpu.memory_space<vmem>>, %arg1: memref<128x128xf32, #tpu.memory_space<vmem>>, %arg2: memref<128x128xf32, #tpu.memory_space<vmem>>, %arg3: memref<1x128xf32, #tpu.memory_space<vmem>>, %arg4: memref<64x128xf32, #tpu.memory_space<vmem>>, %arg5: memref<8x128xf32, #tpu.memory_space<vmem>>, %arg6: memref<8x128xf32, #tpu.memory_space<vmem>>, %arg7: memref<64x128xf32, #tpu.memory_space<vmem>>) attributes {dimension_semantics = [], scalar_prefetch = 0 : i64, scratch_operands = 2 : i64, tpu.core_type = #tpu.core_type<tc>} {
    %c0 = arith.constant 0 : index
    %c0_0 = arith.constant 0 : index
    %0 = vector.load %arg0[%c0, %c0_0] : memref<64x128xf32, #tpu.memory_space<vmem>>, vector<64x128xf32>
    %c0_1 = arith.constant 0 : index
    %c0_2 = arith.constant 0 : index
    %1 = vector.load %arg1[%c0_1, %c0_2] : memref<128x128xf32, #tpu.memory_space<vmem>>, vector<128x128xf32>
    %cst = arith.constant dense<0.000000e+00> : vector<64x128xf32>
    %2 = tpu.matmul %0, %1, %cst {dimension_numbers = #tpu.dot_dimension_numbers<[1], [0], [0], [1], [0, 0, 1, 1], [], []>} : vector<64x128xf32>, vector<128x128xf32>, vector<64x128xf32> -> vector<64x128xf32>
    %c0_3 = arith.constant 0 : index
    %c0_4 = arith.constant 0 : index
    %3 = vector.load %arg3[%c0_3, %c0_4] : memref<1x128xf32, #tpu.memory_space<vmem>>, vector<1x128xf32>
    %4 = vector.broadcast %3 : vector<1x128xf32> to vector<64x128xf32>
    %5 = arith.addf %2, %4 : vector<64x128xf32>
    %c0_5 = arith.constant 0 : index
    %c0_6 = arith.constant 0 : index
    %6 = vector.load %arg7[%c0_5, %c0_6] : memref<64x128xf32, #tpu.memory_space<vmem>>, vector<64x128xf32>
    tpu.vector_store %arg7[%c0_5, %c0_6], %5 {strides = array<i32>} : memref<64x128xf32, #tpu.memory_space<vmem>>, vector<64x128xf32>,
    %cst_7 = arith.constant 0.000000e+00 : f32
    %7 = vector.broadcast %cst_7 : f32 to vector<8x128xf32>
    %c0_8 = arith.constant 0 : index
    %c0_9 = arith.constant 0 : index
    %8 = vector.load %arg6[%c0_8, %c0_9] : memref<8x128xf32, #tpu.memory_space<vmem>>, vector<8x128xf32>
    tpu.vector_store %arg6[%c0_8, %c0_9], %7 {strides = array<i32>} : memref<8x128xf32, #tpu.memory_space<vmem>>, vector<8x128xf32>,
    %c0_i32 = arith.constant 0 : i32
    %c8_i32 = arith.constant 8 : i32
    %9 = arith.muli %c0_i32, %c8_i32 : i32
    %10 = tpu.assume_multiple %9, 8 : i32
    %11 = arith.index_cast %10 : i32 to index
    %c0_10 = arith.constant 0 : index
    %12 = vector.load %arg7[%11, %c0_10] : memref<64x128xf32, #tpu.memory_space<vmem>>, vector<8x128xf32>
    %c0_11 = arith.constant 0 : index
    %c0_12 = arith.constant 0 : index
    %13 = vector.load %arg6[%c0_11, %c0_12] : memref<8x128xf32, #tpu.memory_space<vmem>>, vector<8x128xf32>
    %c0_13 = arith.constant 0 : index
    %c0_14 = arith.constant 0 : index
    %14 = vector.load %arg2[%c0_13, %c0_14] : memref<128x128xf32, #tpu.memory_space<vmem>>, vector<128x128xf32>
    %cst_15 = arith.constant dense<0.000000e+00> : vector<8x128xf32>
    %15 = tpu.matmul %13, %14, %cst_15 {dimension_numbers = #tpu.dot_dimension_numbers<[1], [0], [0], [1], [0, 0, 1, 1], [], []>} : vector<8x128xf32>, vector<128x128xf32>, vector<8x128xf32> -> vector<8x128xf32>
    %16 = arith.addf %12, %15 : vector<8x128xf32>
    %17 = math.tanh %16 : vector<8x128xf32>
    %c0_16 = arith.constant 0 : index
    %c0_17 = arith.constant 0 : index
    %18 = vector.load %arg6[%c0_16, %c0_17] : memref<8x128xf32, #tpu.memory_space<vmem>>, vector<8x128xf32>
    tpu.vector_store %arg6[%c0_16, %c0_17], %17 {strides = array<i32>} : memref<8x128xf32, #tpu.memory_space<vmem>>, vector<8x128xf32>,
    %19 = arith.index_cast %10 : i32 to index
    %c0_18 = arith.constant 0 : index
    %20 = vector.load %arg4[%19, %c0_18] : memref<64x128xf32, #tpu.memory_space<vmem>>, vector<8x128xf32>
    tpu.vector_store %arg4[%19, %c0_18], %17 {strides = array<i32>} : memref<64x128xf32, #tpu.memory_space<vmem>>, vector<8x128xf32>,
    %c1_i32 = arith.constant 1 : i32
    %c8_i32_19 = arith.constant 8 : i32
    %21 = arith.muli %c1_i32, %c8_i32_19 : i32
    %22 = tpu.assume_multiple %21, 8 : i32
    %23 = arith.index_cast %22 : i32 to index
    %c0_20 = arith.constant 0 : index
    %24 = vector.load %arg7[%23, %c0_20] : memref<64x128xf32, #tpu.memory_space<vmem>>, vector<8x128xf32>
    %c0_21 = arith.constant 0 : index
    %c0_22 = arith.constant 0 : index
    %25 = vector.load %arg6[%c0_21, %c0_22] : memref<8x128xf32, #tpu.memory_space<vmem>>, vector<8x128xf32>
    %c0_23 = arith.constant 0 : index
    %c0_24 = arith.constant 0 : index
    %26 = vector.load %arg2[%c0_23, %c0_24] : memref<128x128xf32, #tpu.memory_space<vmem>>, vector<128x128xf32>
    %cst_25 = arith.constant dense<0.000000e+00> : vector<8x128xf32>
    %27 = tpu.matmul %25, %26, %cst_25 {dimension_numbers = #tpu.dot_dimension_numbers<[1], [0], [0], [1], [0, 0, 1, 1], [], []>} : vector<8x128xf32>, vector<128x128xf32>, vector<8x128xf32> -> vector<8x128xf32>
    %28 = arith.addf %24, %27 : vector<8x128xf32>
    %29 = math.tanh %28 : vector<8x128xf32>
    %c0_26 = arith.constant 0 : index
    %c0_27 = arith.constant 0 : index
    %30 = vector.load %arg6[%c0_26, %c0_27] : memref<8x128xf32, #tpu.memory_space<vmem>>, vector<8x128xf32>
    tpu.vector_store %arg6[%c0_26, %c0_27], %29 {strides = array<i32>} : memref<8x128xf32, #tpu.memory_space<vmem>>, vector<8x128xf32>,
    %31 = arith.index_cast %22 : i32 to index
    %c0_28 = arith.constant 0 : index
    %32 = vector.load %arg4[%31, %c0_28] : memref<64x128xf32, #tpu.memory_space<vmem>>, vector<8x128xf32>
    tpu.vector_store %arg4[%31, %c0_28], %29 {strides = array<i32>} : memref<64x128xf32, #tpu.memory_space<vmem>>, vector<8x128xf32>,
    %c2_i32 = arith.constant 2 : i32
    %c8_i32_29 = arith.constant 8 : i32
    %33 = arith.muli %c2_i32, %c8_i32_29 : i32
    %34 = tpu.assume_multiple %33, 8 : i32
    %35 = arith.index_cast %34 : i32 to index
    %c0_30 = arith.constant 0 : index
    %36 = vector.load %arg7[%35, %c0_30] : memref<64x128xf32, #tpu.memory_space<vmem>>, vector<8x128xf32>
    %c0_31 = arith.constant 0 : index
    %c0_32 = arith.constant 0 : index
    %37 = vector.load %arg6[%c0_31, %c0_32] : memref<8x128xf32, #tpu.memory_space<vmem>>, vector<8x128xf32>
    %c0_33 = arith.constant 0 : index
    %c0_34 = arith.constant 0 : index
    %38 = vector.load %arg2[%c0_33, %c0_34] : memref<128x128xf32, #tpu.memory_space<vmem>>, vector<128x128xf32>
    %cst_35 = arith.constant dense<0.000000e+00> : vector<8x128xf32>
    %39 = tpu.matmul %37, %38, %cst_35 {dimension_numbers = #tpu.dot_dimension_numbers<[1], [0], [0], [1], [0, 0, 1, 1], [], []>} : vector<8x128xf32>, vector<128x128xf32>, vector<8x128xf32> -> vector<8x128xf32>
    %40 = arith.addf %36, %39 : vector<8x128xf32>
    %41 = math.tanh %40 : vector<8x128xf32>
    %c0_36 = arith.constant 0 : index
    %c0_37 = arith.constant 0 : index
    %42 = vector.load %arg6[%c0_36, %c0_37] : memref<8x128xf32, #tpu.memory_space<vmem>>, vector<8x128xf32>
    tpu.vector_store %arg6[%c0_36, %c0_37], %41 {strides = array<i32>} : memref<8x128xf32, #tpu.memory_space<vmem>>, vector<8x128xf32>,
    %43 = arith.index_cast %34 : i32 to index
    %c0_38 = arith.constant 0 : index
    %44 = vector.load %arg4[%43, %c0_38] : memref<64x128xf32, #tpu.memory_space<vmem>>, vector<8x128xf32>
    tpu.vector_store %arg4[%43, %c0_38], %41 {strides = array<i32>} : memref<64x128xf32, #tpu.memory_space<vmem>>, vector<8x128xf32>,
    %c3_i32 = arith.constant 3 : i32
    %c8_i32_39 = arith.constant 8 : i32
    %45 = arith.muli %c3_i32, %c8_i32_39 : i32
    %46 = tpu.assume_multiple %45, 8 : i32
    %47 = arith.index_cast %46 : i32 to index
    %c0_40 = arith.constant 0 : index
    %48 = vector.load %arg7[%47, %c0_40] : memref<64x128xf32, #tpu.memory_space<vmem>>, vector<8x128xf32>
    %c0_41 = arith.constant 0 : index
    %c0_42 = arith.constant 0 : index
    %49 = vector.load %arg6[%c0_41, %c0_42] : memref<8x128xf32, #tpu.memory_space<vmem>>, vector<8x128xf32>
    %c0_43 = arith.constant 0 : index
    %c0_44 = arith.constant 0 : index
    %50 = vector.load %arg2[%c0_43, %c0_44] : memref<128x128xf32, #tpu.memory_space<vmem>>, vector<128x128xf32>
    %cst_45 = arith.constant dense<0.000000e+00> : vector<8x128xf32>
    %51 = tpu.matmul %49, %50, %cst_45 {dimension_numbers = #tpu.dot_dimension_numbers<[1], [0], [0], [1], [0, 0, 1, 1], [], []>} : vector<8x128xf32>, vector<128x128xf32>, vector<8x128xf32> -> vector<8x128xf32>
    %52 = arith.addf %48, %51 : vector<8x128xf32>
    %53 = math.tanh %52 : vector<8x128xf32>
    %c0_46 = arith.constant 0 : index
    %c0_47 = arith.constant 0 : index
    %54 = vector.load %arg6[%c0_46, %c0_47] : memref<8x128xf32, #tpu.memory_space<vmem>>, vector<8x128xf32>
    tpu.vector_store %arg6[%c0_46, %c0_47], %53 {strides = array<i32>} : memref<8x128xf32, #tpu.memory_space<vmem>>, vector<8x128xf32>,
    %55 = arith.index_cast %46 : i32 to index
    %c0_48 = arith.constant 0 : index
    %56 = vector.load %arg4[%55, %c0_48] : memref<64x128xf32, #tpu.memory_space<vmem>>, vector<8x128xf32>
    tpu.vector_store %arg4[%55, %c0_48], %53 {strides = array<i32>} : memref<64x128xf32, #tpu.memory_space<vmem>>, vector<8x128xf32>,
    %c4_i32 = arith.constant 4 : i32
    %c8_i32_49 = arith.constant 8 : i32
    %57 = arith.muli %c4_i32, %c8_i32_49 : i32
    %58 = tpu.assume_multiple %57, 8 : i32
    %59 = arith.index_cast %58 : i32 to index
    %c0_50 = arith.constant 0 : index
    %60 = vector.load %arg7[%59, %c0_50] : memref<64x128xf32, #tpu.memory_space<vmem>>, vector<8x128xf32>
    %c0_51 = arith.constant 0 : index
    %c0_52 = arith.constant 0 : index
    %61 = vector.load %arg6[%c0_51, %c0_52] : memref<8x128xf32, #tpu.memory_space<vmem>>, vector<8x128xf32>
    %c0_53 = arith.constant 0 : index
    %c0_54 = arith.constant 0 : index
    %62 = vector.load %arg2[%c0_53, %c0_54] : memref<128x128xf32, #tpu.memory_space<vmem>>, vector<128x128xf32>
    %cst_55 = arith.constant dense<0.000000e+00> : vector<8x128xf32>
    %63 = tpu.matmul %61, %62, %cst_55 {dimension_numbers = #tpu.dot_dimension_numbers<[1], [0], [0], [1], [0, 0, 1, 1], [], []>} : vector<8x128xf32>, vector<128x128xf32>, vector<8x128xf32> -> vector<8x128xf32>
    %64 = arith.addf %60, %63 : vector<8x128xf32>
    %65 = math.tanh %64 : vector<8x128xf32>
    %c0_56 = arith.constant 0 : index
    %c0_57 = arith.constant 0 : index
    %66 = vector.load %arg6[%c0_56, %c0_57] : memref<8x128xf32, #tpu.memory_space<vmem>>, vector<8x128xf32>
    tpu.vector_store %arg6[%c0_56, %c0_57], %65 {strides = array<i32>} : memref<8x128xf32, #tpu.memory_space<vmem>>, vector<8x128xf32>,
    %67 = arith.index_cast %58 : i32 to index
    %c0_58 = arith.constant 0 : index
    %68 = vector.load %arg4[%67, %c0_58] : memref<64x128xf32, #tpu.memory_space<vmem>>, vector<8x128xf32>
    tpu.vector_store %arg4[%67, %c0_58], %65 {strides = array<i32>} : memref<64x128xf32, #tpu.memory_space<vmem>>, vector<8x128xf32>,
    %c5_i32 = arith.constant 5 : i32
    %c8_i32_59 = arith.constant 8 : i32
    %69 = arith.muli %c5_i32, %c8_i32_59 : i32
    %70 = tpu.assume_multiple %69, 8 : i32
    %71 = arith.index_cast %70 : i32 to index
    %c0_60 = arith.constant 0 : index
    %72 = vector.load %arg7[%71, %c0_60] : memref<64x128xf32, #tpu.memory_space<vmem>>, vector<8x128xf32>
    %c0_61 = arith.constant 0 : index
    %c0_62 = arith.constant 0 : index
    %73 = vector.load %arg6[%c0_61, %c0_62] : memref<8x128xf32, #tpu.memory_space<vmem>>, vector<8x128xf32>
    %c0_63 = arith.constant 0 : index
    %c0_64 = arith.constant 0 : index
    %74 = vector.load %arg2[%c0_63, %c0_64] : memref<128x128xf32, #tpu.memory_space<vmem>>, vector<128x128xf32>
    %cst_65 = arith.constant dense<0.000000e+00> : vector<8x128xf32>
    %75 = tpu.matmul %73, %74, %cst_65 {dimension_numbers = #tpu.dot_dimension_numbers<[1], [0], [0], [1], [0, 0, 1, 1], [], []>} : vector<8x128xf32>, vector<128x128xf32>, vector<8x128xf32> -> vector<8x128xf32>
    %76 = arith.addf %72, %75 : vector<8x128xf32>
    %77 = math.tanh %76 : vector<8x128xf32>
    %c0_66 = arith.constant 0 : index
    %c0_67 = arith.constant 0 : index
    %78 = vector.load %arg6[%c0_66, %c0_67] : memref<8x128xf32, #tpu.memory_space<vmem>>, vector<8x128xf32>
    tpu.vector_store %arg6[%c0_66, %c0_67], %77 {strides = array<i32>} : memref<8x128xf32, #tpu.memory_space<vmem>>, vector<8x128xf32>,
    %79 = arith.index_cast %70 : i32 to index
    %c0_68 = arith.constant 0 : index
    %80 = vector.load %arg4[%79, %c0_68] : memref<64x128xf32, #tpu.memory_space<vmem>>, vector<8x128xf32>
    tpu.vector_store %arg4[%79, %c0_68], %77 {strides = array<i32>} : memref<64x128xf32, #tpu.memory_space<vmem>>, vector<8x128xf32>,
    %c6_i32 = arith.constant 6 : i32
    %c8_i32_69 = arith.constant 8 : i32
    %81 = arith.muli %c6_i32, %c8_i32_69 : i32
    %82 = tpu.assume_multiple %81, 8 : i32
    %83 = arith.index_cast %82 : i32 to index
    %c0_70 = arith.constant 0 : index
    %84 = vector.load %arg7[%83, %c0_70] : memref<64x128xf32, #tpu.memory_space<vmem>>, vector<8x128xf32>
    %c0_71 = arith.constant 0 : index
    %c0_72 = arith.constant 0 : index
    %85 = vector.load %arg6[%c0_71, %c0_72] : memref<8x128xf32, #tpu.memory_space<vmem>>, vector<8x128xf32>
    %c0_73 = arith.constant 0 : index
    %c0_74 = arith.constant 0 : index
    %86 = vector.load %arg2[%c0_73, %c0_74] : memref<128x128xf32, #tpu.memory_space<vmem>>, vector<128x128xf32>
    %cst_75 = arith.constant dense<0.000000e+00> : vector<8x128xf32>
    %87 = tpu.matmul %85, %86, %cst_75 {dimension_numbers = #tpu.dot_dimension_numbers<[1], [0], [0], [1], [0, 0, 1, 1], [], []>} : vector<8x128xf32>, vector<128x128xf32>, vector<8x128xf32> -> vector<8x128xf32>
    %88 = arith.addf %84, %87 : vector<8x128xf32>
    %89 = math.tanh %88 : vector<8x128xf32>
    %c0_76 = arith.constant 0 : index
    %c0_77 = arith.constant 0 : index
    %90 = vector.load %arg6[%c0_76, %c0_77] : memref<8x128xf32, #tpu.memory_space<vmem>>, vector<8x128xf32>
    tpu.vector_store %arg6[%c0_76, %c0_77], %89 {strides = array<i32>} : memref<8x128xf32, #tpu.memory_space<vmem>>, vector<8x128xf32>,
    %91 = arith.index_cast %82 : i32 to index
    %c0_78 = arith.constant 0 : index
    %92 = vector.load %arg4[%91, %c0_78] : memref<64x128xf32, #tpu.memory_space<vmem>>, vector<8x128xf32>
    tpu.vector_store %arg4[%91, %c0_78], %89 {strides = array<i32>} : memref<64x128xf32, #tpu.memory_space<vmem>>, vector<8x128xf32>,
    %c7_i32 = arith.constant 7 : i32
    %c8_i32_79 = arith.constant 8 : i32
    %93 = arith.muli %c7_i32, %c8_i32_79 : i32
    %94 = tpu.assume_multiple %93, 8 : i32
    %95 = arith.index_cast %94 : i32 to index
    %c0_80 = arith.constant 0 : index
    %96 = vector.load %arg7[%95, %c0_80] : memref<64x128xf32, #tpu.memory_space<vmem>>, vector<8x128xf32>
    %c0_81 = arith.constant 0 : index
    %c0_82 = arith.constant 0 : index
    %97 = vector.load %arg6[%c0_81, %c0_82] : memref<8x128xf32, #tpu.memory_space<vmem>>, vector<8x128xf32>
    %c0_83 = arith.constant 0 : index
    %c0_84 = arith.constant 0 : index
    %98 = vector.load %arg2[%c0_83, %c0_84] : memref<128x128xf32, #tpu.memory_space<vmem>>, vector<128x128xf32>
    %cst_85 = arith.constant dense<0.000000e+00> : vector<8x128xf32>
    %99 = tpu.matmul %97, %98, %cst_85 {dimension_numbers = #tpu.dot_dimension_numbers<[1], [0], [0], [1], [0, 0, 1, 1], [], []>} : vector<8x128xf32>, vector<128x128xf32>, vector<8x128xf32> -> vector<8x128xf32>
    %100 = arith.addf %96, %99 : vector<8x128xf32>
    %101 = math.tanh %100 : vector<8x128xf32>
    %c0_86 = arith.constant 0 : index
    %c0_87 = arith.constant 0 : index
    %102 = vector.load %arg6[%c0_86, %c0_87] : memref<8x128xf32, #tpu.memory_space<vmem>>, vector<8x128xf32>
    tpu.vector_store %arg6[%c0_86, %c0_87], %101 {strides = array<i32>} : memref<8x128xf32, #tpu.memory_space<vmem>>, vector<8x128xf32>,
    %103 = arith.index_cast %94 : i32 to index
    %c0_88 = arith.constant 0 : index
    %104 = vector.load %arg4[%103, %c0_88] : memref<64x128xf32, #tpu.memory_space<vmem>>, vector<8x128xf32>
    tpu.vector_store %arg4[%103, %c0_88], %101 {strides = array<i32>} : memref<64x128xf32, #tpu.memory_space<vmem>>, vector<8x128xf32>,
    %c8_i32_89 = arith.constant 8 : i32
    %c0_90 = arith.constant 0 : index
    %c0_91 = arith.constant 0 : index
    %105 = vector.load %arg6[%c0_90, %c0_91] : memref<8x128xf32, #tpu.memory_space<vmem>>, vector<8x128xf32>
    %c0_92 = arith.constant 0 : index
    %c0_93 = arith.constant 0 : index
    %106 = vector.load %arg5[%c0_92, %c0_93] : memref<8x128xf32, #tpu.memory_space<vmem>>, vector<8x128xf32>
    tpu.vector_store %arg5[%c0_92, %c0_93], %105 {strides = array<i32>} : memref<8x128xf32, #tpu.memory_space<vmem>>, vector<8x128xf32>,
    return
  }
}

module attributes {stable_mosaic.version = 11 : i64} {
  func.func @_linear_kernel(%arg0: i32, %arg1: memref<64x128xf32, #tpu.memory_space<vmem>>, %arg2: memref<128x128xf32, #tpu.memory_space<vmem>>, %arg3: memref<1x128xf32, #tpu.memory_space<vmem>>, %arg4: memref<64x128xf32, #tpu.memory_space<vmem>>) attributes {dimension_semantics = [#tpu.dimension_semantics<parallel>], iteration_bounds = array<i64: 1>, scalar_prefetch = 0 : i64, scratch_operands = 0 : i64, tpu.core_type = #tpu.core_type<tc>, window_params = [{transform_indices = @transform_0, window_bounds = array<i64: 64, 128>}, {pipeline_mode = #tpu.pipeline_mode<synchronous>, transform_indices = @transform_1, window_bounds = array<i64: 128, 128>}, {pipeline_mode = #tpu.pipeline_mode<synchronous>, transform_indices = @transform_2, window_bounds = array<i64: 1, 128>}, {transform_indices = @transform_3, window_bounds = array<i64: 64, 128>}]} {
    %c0 = arith.constant 0 : index
    %c0_0 = arith.constant 0 : index
    %0 = vector.load %arg1[%c0, %c0_0] : memref<64x128xf32, #tpu.memory_space<vmem>>, vector<64x128xf32>
    %c0_1 = arith.constant 0 : index
    %c0_2 = arith.constant 0 : index
    %1 = vector.load %arg2[%c0_1, %c0_2] : memref<128x128xf32, #tpu.memory_space<vmem>>, vector<128x128xf32>
    %cst = arith.constant dense<0.000000e+00> : vector<64x128xf32>
    %2 = tpu.matmul %0, %1, %cst {dimension_numbers = #tpu.dot_dimension_numbers<[1], [0], [0], [1], [0, 0, 1, 1], [], []>} : vector<64x128xf32>, vector<128x128xf32>, vector<64x128xf32> -> vector<64x128xf32>
    %c0_3 = arith.constant 0 : index
    %c0_4 = arith.constant 0 : index
    %3 = vector.load %arg3[%c0_3, %c0_4] : memref<1x128xf32, #tpu.memory_space<vmem>>, vector<1x128xf32>
    %4 = vector.broadcast %3 : vector<1x128xf32> to vector<64x128xf32>
    %5 = arith.addf %2, %4 : vector<64x128xf32>
    %c0_5 = arith.constant 0 : index
    %c0_6 = arith.constant 0 : index
    %6 = vector.load %arg4[%c0_5, %c0_6] : memref<64x128xf32, #tpu.memory_space<vmem>>, vector<64x128xf32>
    tpu.vector_store %arg4[%c0_5, %c0_6], %5 {strides = array<i32>} : memref<64x128xf32, #tpu.memory_space<vmem>>, vector<64x128xf32>,
    return
  }
  func.func @transform_0(%arg0: i32) -> (i32, i32) {
    %c0_i32 = arith.constant 0 : i32
    %c0_i32_0 = arith.constant 0 : i32
    return %arg0, %c0_i32 : i32, i32
  }
  func.func @transform_1(%arg0: i32) -> (i32, i32) {
    %c0_i32 = arith.constant 0 : i32
    %c0_i32_0 = arith.constant 0 : i32
    %c0_i32_1 = arith.constant 0 : i32
    return %c0_i32, %c0_i32_0 : i32, i32
  }
  func.func @transform_2(%arg0: i32) -> (i32, i32) {
    %c0_i32 = arith.constant 0 : i32
    %c0_i32_0 = arith.constant 0 : i32
    %c0_i32_1 = arith.constant 0 : i32
    return %c0_i32, %c0_i32_0 : i32, i32
  }
  func.func @transform_3(%arg0: i32) -> (i32, i32) {
    %c0_i32 = arith.constant 0 : i32
    %c0_i32_0 = arith.constant 0 : i32
    return %arg0, %c0_i32 : i32, i32
  }
}

</mosaic_0001>

<llo_original>
// kernel: rnn_forward.5
$region0: #{rnn_forward.5}
  #allocation0 [shape = 'u32[]', space=smem, size = 0x4, offset = 0x4, fixed_abs, tag = 'smem constant byte address 0x4 - core index']
  #allocation1 [shape = 'u32[144,128]{1,0:T(1,128)}', space=vmem, size = 0x12000, scoped, tag = 'internal scratch']
  %s0 = inlined_call_operand.vmem [shape: f32[64,128], index: 0, kind: input, shape index: {}]
  %s1 = inlined_call_operand.vmem [shape: f32[128,128], index: 1, kind: input, shape index: {}]
  %s2 = inlined_call_operand.vmem [shape: f32[1,128], index: 2, kind: input, shape index: {}]
  %s3 = inlined_call_operand.vmem [shape: f32[64,128], index: 3, kind: output, shape index: {}]
  %s4 = sld [smem:[#allocation0]]
  $region22: #{rnn_forward.5} parent=0
    _
  %s6 = ssub.s32 1, %s4
  %s7 = scalar_select 0, %s6, %s4
  // Predicated region
  $region2: #{rnn_forward.5} parent=0 // pred_check
    _
  $region3: #{rnn_forward.5} parent=0 // pred_check_branch
    %9 = sbr.rel (0) target = $region5
  $region4: #{rnn_forward.5} parent=0 // pred_region
    _
  $region5: #{rnn_forward.5} parent=0 // pred_fallthru
    _
  // Predicated region
  $region6: #{rnn_forward.5} parent=0 // pred_check
    _
  $region7: #{rnn_forward.5} parent=0 // pred_check_branch
    %11 = sbr.rel (0) target = $region9
  $region8: #{rnn_forward.5} parent=0 // pred_region
    _
  $region9: #{rnn_forward.5} parent=0 // pred_fallthru
    _
  // Predicated region
  $region10: #{rnn_forward.5} parent=0 // pred_check
    _
  $region11: #{rnn_forward.5} parent=0 // pred_check_branch
    %13 = sbr.rel (0) target = $region13
  $region12: #{rnn_forward.5} parent=0 // pred_region
    _
  $region13: #{rnn_forward.5} parent=0 // pred_fallthru
    _
  %v14 = vld [vmem:[%s0] sm:$0xff]
  %v15 = vld [vmem:[%s0 + $0x8] sm:$0xff]
  %v16 = vld [vmem:[%s0 + $0x10] sm:$0xff]
  %v17 = vld [vmem:[%s0 + $0x18] sm:$0xff]
  %v18 = vld [vmem:[%s0 + $0x20] sm:$0xff]
  %v19 = vld [vmem:[%s0 + $0x28] sm:$0xff]
  %v20 = vld [vmem:[%s0 + $0x30] sm:$0xff]
  %v21 = vld [vmem:[%s0 + $0x38] sm:$0xff]
  %v22 = vld [vmem:[%s1] sm:$0xff]
  %v23 = vld [vmem:[%s1 + $0x8] sm:$0xff]
  %v24 = vld [vmem:[%s1 + $0x10] sm:$0xff]
  %v25 = vld [vmem:[%s1 + $0x18] sm:$0xff]
  %v26 = vld [vmem:[%s1 + $0x20] sm:$0xff]
  %v27 = vld [vmem:[%s1 + $0x28] sm:$0xff]
  %v28 = vld [vmem:[%s1 + $0x30] sm:$0xff]
  %v29 = vld [vmem:[%s1 + $0x38] sm:$0xff]
  %v30 = vld [vmem:[%s1 + $0x40] sm:$0xff]
  %v31 = vld [vmem:[%s1 + $0x48] sm:$0xff]
  %v32 = vld [vmem:[%s1 + $0x50] sm:$0xff]
  %v33 = vld [vmem:[%s1 + $0x58] sm:$0xff]
  %v34 = vld [vmem:[%s1 + $0x60] sm:$0xff]
  %v35 = vld [vmem:[%s1 + $0x68] sm:$0xff]
  %v36 = vld [vmem:[%s1 + $0x70] sm:$0xff]
  %v37 = vld [vmem:[%s1 + $0x78] sm:$0xff]
  %v38 = vld [vmem:[%s2] sm:$0x1]
  %v40 = vlaneseq
  %v41 = vshrl.u32 %v40, 7
  %v42 = vsub.s32 0, %v41
  %v43 = vrot.slane %v38, %v42
  %45 = vmatprep.subr.mxu0 0.0
  %46 = vmatpush1.msra.mxu0 %v37
  %47 = vmatprep.subr.mxu0 0.0
  %48 = vmatpush1.msra.mxu0 %v36
  %49 = vmatprep.subr.mxu0 0.0
  %50 = vmatpush1.msra.mxu0 %v35
  %51 = vmatprep.subr.mxu0 0.0
  %52 = vmatpush1.msra.mxu0 %v34
  %53 = vmatprep.subr.mxu0 0.0
  %54 = vmatpush1.msra.mxu0 %v33
  %55 = vmatprep.subr.mxu0 0.0
  %56 = vmatpush1.msra.mxu0 %v32
  %57 = vmatprep.subr.mxu0 0.0
  %58 = vmatpush1.msra.mxu0 %v31
  %59 = vmatprep.subr.mxu0 0.0
  %60 = vmatpush1.msra.mxu0 %v30
  %61 = vmatprep.subr.mxu0 0.0
  %62 = vmatpush1.msra.mxu0 %v29
  %63 = vmatprep.subr.mxu0 0.0
  %64 = vmatpush1.msra.mxu0 %v28
  %65 = vmatprep.subr.mxu0 0.0
  %66 = vmatpush1.msra.mxu0 %v27
  %67 = vmatprep.subr.mxu0 0.0
  %68 = vmatpush1.msra.mxu0 %v26
  %69 = vmatprep.subr.mxu0 0.0
  %70 = vmatpush1.msra.mxu0 %v25
  %71 = vmatprep.subr.mxu0 0.0
  %72 = vmatpush1.msra.mxu0 %v24
  %73 = vmatprep.subr.mxu0 0.0
  %74 = vmatpush1.msra.mxu0 %v23
  %75 = vmatprep.subr.mxu0 0.0
  %76 = vmatpush1.msra.mxu0 %v22
  %77 = vmatprep.subr.mxu0 0.0
  %78 = vmatpush2.msra.mxu0 0.0
  %79 = vmatprep.subr.mxu0 0.0
  %80 = vmatpush2.msra.mxu0 0.0
  %81 = vmatprep.subr.mxu0 0.0
  %82 = vmatpush2.msra.mxu0 0.0
  %83 = vmatprep.subr.mxu0 0.0
  %84 = vmatpush2.msra.mxu0 0.0
  %85 = vmatprep.subr.mxu0 0.0
  %86 = vmatpush2.msra.mxu0 0.0
  %87 = vmatprep.subr.mxu0 0.0
  %88 = vmatpush2.msra.mxu0 0.0
  %89 = vmatprep.subr.mxu0 0.0
  %90 = vmatpush2.msra.mxu0 0.0
  %91 = vmatprep.subr.mxu0 0.0
  %92 = vmatpush2.msra.mxu0 0.0
  %93 = vmatprep.subr.mxu0 0.0
  %94 = vmatpush2.msra.mxu0 0.0
  %95 = vmatprep.subr.mxu0 0.0
  %96 = vmatpush2.msra.mxu0 0.0
  %97 = vmatprep.subr.mxu0 0.0
  %98 = vmatpush2.msra.mxu0 0.0
  %99 = vmatprep.subr.mxu0 0.0
  %100 = vmatpush2.msra.mxu0 0.0
  %101 = vmatprep.subr.mxu0 0.0
  %102 = vmatpush2.msra.mxu0 0.0
  %103 = vmatprep.subr.mxu0 0.0
  %104 = vmatpush2.msra.mxu0 0.0
  %105 = vmatprep.subr.mxu0 0.0
  %106 = vmatpush2.msra.mxu0 0.0
  %107 = vmatprep.subr.mxu0 0.0
  %108 = vmatpush2.msra.mxu0 0.0
  %109 = vmatprep.mubr.f32.mxu0 0.0
  %110 = vmatmul.mubr.f32.gmra.mxu0 %v14
  %v111 = vpop.f32.mrf.mxu0
  %v112 = vadd.f32 %v43, %v111
  %v113 = vpop.f32.mrf.mxu0
  %114 = vmatprep.mubr.f32.mxu0 0.0
  %115 = vmatmul.mubr.f32.gmra.mxu0 %v15
  %v116 = vpop.f32.mrf.mxu0
  %v117 = vadd.f32 %v43, %v116
  %v118 = vpop.f32.mrf.mxu0
  %119 = vmatprep.mubr.f32.mxu0 0.0
  %120 = vmatmul.mubr.f32.gmra.mxu0 %v16
  %v121 = vpop.f32.mrf.mxu0
  %v122 = vadd.f32 %v43, %v121
  %v123 = vpop.f32.mrf.mxu0
  %124 = vmatprep.mubr.f32.mxu0 0.0
  %125 = vmatmul.mubr.f32.gmra.mxu0 %v17
  %v126 = vpop.f32.mrf.mxu0
  %v127 = vadd.f32 %v43, %v126
  %v128 = vpop.f32.mrf.mxu0
  %129 = vmatprep.mubr.f32.mxu0 0.0
  %130 = vmatmul.mubr.f32.gmra.mxu0 %v18
  %v131 = vpop.f32.mrf.mxu0
  %v132 = vadd.f32 %v43, %v131
  %v133 = vpop.f32.mrf.mxu0
  %134 = vmatprep.mubr.f32.mxu0 0.0
  %135 = vmatmul.mubr.f32.gmra.mxu0 %v19
  %v136 = vpop.f32.mrf.mxu0
  %v137 = vadd.f32 %v43, %v136
  %v138 = vpop.f32.mrf.mxu0
  %139 = vmatprep.mubr.f32.mxu0 0.0
  %140 = vmatmul.mubr.f32.gmra.mxu0 %v20
  %v141 = vpop.f32.mrf.mxu0
  %v142 = vadd.f32 %v43, %v141
  %v143 = vpop.f32.mrf.mxu0
  %144 = vmatprep.mubr.f32.mxu0 0.0
  %145 = vmatmul.mubr.f32.gmra.mxu0 %v21
  %v146 = vpop.f32.mrf.mxu0
  %v147 = vadd.f32 %v43, %v146
  %v148 = vpop.f32.mrf.mxu0
  %149 = vdwg.mxu0
  %150 = vst [vmem:[%s3] sm:$0xff] %v112
  %151 = vst [vmem:[%s3 + $0x8] sm:$0xff] %v117
  %152 = vst [vmem:[%s3 + $0x10] sm:$0xff] %v122
  %153 = vst [vmem:[%s3 + $0x18] sm:$0xff] %v127
  %154 = vst [vmem:[%s3 + $0x20] sm:$0xff] %v132
  %155 = vst [vmem:[%s3 + $0x28] sm:$0xff] %v137
  %156 = vst [vmem:[%s3 + $0x30] sm:$0xff] %v142
  %157 = vst [vmem:[%s3 + $0x38] sm:$0xff] %v147
  // Predicated region
  $region14: #{rnn_forward.5} parent=0 // pred_check
    _
  $region15: #{rnn_forward.5} parent=0 // pred_check_branch
    %159 = sbr.rel (0) target = $region17
  $region16: #{rnn_forward.5} parent=0 // pred_region
    _
  $region17: #{rnn_forward.5} parent=0 // pred_fallthru
    _
  // Predicated region
  $region18: #{rnn_forward.5} parent=0 // pred_check
    _
  $region19: #{rnn_forward.5} parent=0 // pred_check_branch
    %161 = sbr.rel (0) target = $region21
  $region20: #{rnn_forward.5} parent=0 // pred_region
    _
  $region21: #{rnn_forward.5} parent=0 // pred_fallthru
    _

// kernel: rnn_forward.4
$region0: #{rnn_forward.4}
  #allocation0 [shape = 'u32[]', space=smem, size = 0x4, offset = 0x4, fixed_abs, tag = 'smem constant byte address 0x4 - core index']
  #allocation1 [shape = 'u32[144,128]{1,0:T(1,128)}', space=vmem, size = 0x12000, scoped, tag = 'internal scratch']
  #allocation2 [shape = 'f32[8,128]{1,0:T(8,128)}', space=vmem, size = 0x1000, scoped, tag = 'scratch operand']
  #allocation3 [shape = 'f32[64,128]{1,0:T(8,128)}', space=vmem, size = 0x8000, scoped, tag = 'scratch operand']
  %s0 = inlined_call_operand.vmem [shape: f32[64,128], index: 0, kind: input, shape index: {}]
  %s1 = inlined_call_operand.vmem [shape: f32[128,128], index: 1, kind: input, shape index: {}]
  %s2 = inlined_call_operand.vmem [shape: f32[128,128], index: 2, kind: input, shape index: {}]
  %s3 = inlined_call_operand.vmem [shape: f32[1,128], index: 3, kind: input, shape index: {}]
  %s4 = inlined_call_operand.vmem [shape: f32[64,128], index: 4, kind: output, shape index: {0}]
  %s5 = inlined_call_operand.vmem [shape: f32[8,128], index: 5, kind: output, shape index: {1}]
  %6 = xla_tuple %s4, %s5
  %s7 = sld [smem:[#allocation0]]
  $region34: #{rnn_forward.4} parent=0
    _
  %s9 = ssub.s32 1, %s7
  %s10 = scalar_select 0, %s9, %s7
  // Predicated region
  $region2: #{rnn_forward.4} parent=0 // pred_check
    _
  $region3: #{rnn_forward.4} parent=0 // pred_check_branch
    %12 = sbr.rel (0) target = $region5
  $region4: #{rnn_forward.4} parent=0 // pred_region
    _
  $region5: #{rnn_forward.4} parent=0 // pred_fallthru
    _
  // Predicated region
  $region6: #{rnn_forward.4} parent=0 // pred_check
    _
  $region7: #{rnn_forward.4} parent=0 // pred_check_branch
    %14 = sbr.rel (0) target = $region9
  $region8: #{rnn_forward.4} parent=0 // pred_region
    _
  $region9: #{rnn_forward.4} parent=0 // pred_fallthru
    _
  // Predicated region
  $region10: #{rnn_forward.4} parent=0 // pred_check
    _
  $region11: #{rnn_forward.4} parent=0 // pred_check_branch
    %16 = sbr.rel (0) target = $region13
  $region12: #{rnn_forward.4} parent=0 // pred_region
    _
  $region13: #{rnn_forward.4} parent=0 // pred_fallthru
    _
  // Predicated region
  $region14: #{rnn_forward.4} parent=0 // pred_check
    _
  $region15: #{rnn_forward.4} parent=0 // pred_check_branch
    %18 = sbr.rel (0) target = $region17
  $region16: #{rnn_forward.4} parent=0 // pred_region
    _
  $region17: #{rnn_forward.4} parent=0 // pred_fallthru
    _
  %v19 = vld [vmem:[%s0] sm:$0xff]
  %v20 = vld [vmem:[%s0 + $0x8] sm:$0xff]
  %v21 = vld [vmem:[%s0 + $0x10] sm:$0xff]
  %v22 = vld [vmem:[%s0 + $0x18] sm:$0xff]
  %v23 = vld [vmem:[%s0 + $0x20] sm:$0xff]
  %v24 = vld [vmem:[%s0 + $0x28] sm:$0xff]
  %v25 = vld [vmem:[%s0 + $0x30] sm:$0xff]
  %v26 = vld [vmem:[%s0 + $0x38] sm:$0xff]
  %v27 = vld [vmem:[%s1] sm:$0xff]
  %v28 = vld [vmem:[%s1 + $0x8] sm:$0xff]
  %v29 = vld [vmem:[%s1 + $0x10] sm:$0xff]
  %v30 = vld [vmem:[%s1 + $0x18] sm:$0xff]
  %v31 = vld [vmem:[%s1 + $0x20] sm:$0xff]
  %v32 = vld [vmem:[%s1 + $0x28] sm:$0xff]
  %v33 = vld [vmem:[%s1 + $0x30] sm:$0xff]
  %v34 = vld [vmem:[%s1 + $0x38] sm:$0xff]
  %v35 = vld [vmem:[%s1 + $0x40] sm:$0xff]
  %v36 = vld [vmem:[%s1 + $0x48] sm:$0xff]
  %v37 = vld [vmem:[%s1 + $0x50] sm:$0xff]
  %v38 = vld [vmem:[%s1 + $0x58] sm:$0xff]
  %v39 = vld [vmem:[%s1 + $0x60] sm:$0xff]
  %v40 = vld [vmem:[%s1 + $0x68] sm:$0xff]
  %v41 = vld [vmem:[%s1 + $0x70] sm:$0xff]
  %v42 = vld [vmem:[%s1 + $0x78] sm:$0xff]
  %v43 = vld [vmem:[%s3] sm:$0x1]
  %v45 = vlaneseq
  %v46 = vshrl.u32 %v45, 7
  %v47 = vsub.s32 0, %v46
  %v48 = vrot.slane %v43, %v47
  %50 = vmatprep.subr.mxu0 0.0
  %51 = vmatpush1.msra.mxu0 %v42
  %52 = vmatprep.subr.mxu0 0.0
  %53 = vmatpush1.msra.mxu0 %v41
  %54 = vmatprep.subr.mxu0 0.0
  %55 = vmatpush1.msra.mxu0 %v40
  %56 = vmatprep.subr.mxu0 0.0
  %57 = vmatpush1.msra.mxu0 %v39
  %58 = vmatprep.subr.mxu0 0.0
  %59 = vmatpush1.msra.mxu0 %v38
  %60 = vmatprep.subr.mxu0 0.0
  %61 = vmatpush1.msra.mxu0 %v37
  %62 = vmatprep.subr.mxu0 0.0
  %63 = vmatpush1.msra.mxu0 %v36
  %64 = vmatprep.subr.mxu0 0.0
  %65 = vmatpush1.msra.mxu0 %v35
  %66 = vmatprep.subr.mxu0 0.0
  %67 = vmatpush1.msra.mxu0 %v34
  %68 = vmatprep.subr.mxu0 0.0
  %69 = vmatpush1.msra.mxu0 %v33
  %70 = vmatprep.subr.mxu0 0.0
  %71 = vmatpush1.msra.mxu0 %v32
  %72 = vmatprep.subr.mxu0 0.0
  %73 = vmatpush1.msra.mxu0 %v31
  %74 = vmatprep.subr.mxu0 0.0
  %75 = vmatpush1.msra.mxu0 %v30
  %76 = vmatprep.subr.mxu0 0.0
  %77 = vmatpush1.msra.mxu0 %v29
  %78 = vmatprep.subr.mxu0 0.0
  %79 = vmatpush1.msra.mxu0 %v28
  %80 = vmatprep.subr.mxu0 0.0
  %81 = vmatpush1.msra.mxu0 %v27
  %82 = vmatprep.subr.mxu0 0.0
  %83 = vmatpush2.msra.mxu0 0.0
  %84 = vmatprep.subr.mxu0 0.0
  %85 = vmatpush2.msra.mxu0 0.0
  %86 = vmatprep.subr.mxu0 0.0
  %87 = vmatpush2.msra.mxu0 0.0
  %88 = vmatprep.subr.mxu0 0.0
  %89 = vmatpush2.msra.mxu0 0.0
  %90 = vmatprep.subr.mxu0 0.0
  %91 = vmatpush2.msra.mxu0 0.0
  %92 = vmatprep.subr.mxu0 0.0
  %93 = vmatpush2.msra.mxu0 0.0
  %94 = vmatprep.subr.mxu0 0.0
  %95 = vmatpush2.msra.mxu0 0.0
  %96 = vmatprep.subr.mxu0 0.0
  %97 = vmatpush2.msra.mxu0 0.0
  %98 = vmatprep.subr.mxu0 0.0
  %99 = vmatpush2.msra.mxu0 0.0
  %100 = vmatprep.subr.mxu0 0.0
  %101 = vmatpush2.msra.mxu0 0.0
  %102 = vmatprep.subr.mxu0 0.0
  %103 = vmatpush2.msra.mxu0 0.0
  %104 = vmatprep.subr.mxu0 0.0
  %105 = vmatpush2.msra.mxu0 0.0
  %106 = vmatprep.subr.mxu0 0.0
  %107 = vmatpush2.msra.mxu0 0.0
  %108 = vmatprep.subr.mxu0 0.0
  %109 = vmatpush2.msra.mxu0 0.0
  %110 = vmatprep.subr.mxu0 0.0
  %111 = vmatpush2.msra.mxu0 0.0
  %112 = vmatprep.subr.mxu0 0.0
  %113 = vmatpush2.msra.mxu0 0.0
  %114 = vmatprep.mubr.f32.mxu0 0.0
  %115 = vmatmul.mubr.f32.gmra.mxu0 %v19
  %v116 = vpop.f32.mrf.mxu0
  %v117 = vadd.f32 %v48, %v116
  %v118 = vpop.f32.mrf.mxu0
  %119 = vmatprep.mubr.f32.mxu0 0.0
  %120 = vmatmul.mubr.f32.gmra.mxu0 %v20
  %v121 = vpop.f32.mrf.mxu0
  %v122 = vadd.f32 %v48, %v121
  %v123 = vpop.f32.mrf.mxu0
  %124 = vmatprep.mubr.f32.mxu0 0.0
  %125 = vmatmul.mubr.f32.gmra.mxu0 %v21
  %v126 = vpop.f32.mrf.mxu0
  %v127 = vadd.f32 %v48, %v126
  %v128 = vpop.f32.mrf.mxu0
  %129 = vmatprep.mubr.f32.mxu0 0.0
  %130 = vmatmul.mubr.f32.gmra.mxu0 %v22
  %v131 = vpop.f32.mrf.mxu0
  %v132 = vadd.f32 %v48, %v131
  %v133 = vpop.f32.mrf.mxu0
  %134 = vmatprep.mubr.f32.mxu0 0.0
  %135 = vmatmul.mubr.f32.gmra.mxu0 %v23
  %v136 = vpop.f32.mrf.mxu0
  %v137 = vadd.f32 %v48, %v136
  %v138 = vpop.f32.mrf.mxu0
  %139 = vmatprep.mubr.f32.mxu0 0.0
  %140 = vmatmul.mubr.f32.gmra.mxu0 %v24
  %v141 = vpop.f32.mrf.mxu0
  %v142 = vadd.f32 %v48, %v141
  %v143 = vpop.f32.mrf.mxu0
  %144 = vmatprep.mubr.f32.mxu0 0.0
  %145 = vmatmul.mubr.f32.gmra.mxu0 %v25
  %v146 = vpop.f32.mrf.mxu0
  %v147 = vadd.f32 %v48, %v146
  %v148 = vpop.f32.mrf.mxu0
  %149 = vmatprep.mubr.f32.mxu0 0.0
  %150 = vmatmul.mubr.f32.gmra.mxu0 %v26
  %v151 = vpop.f32.mrf.mxu0
  %v152 = vadd.f32 %v48, %v151
  %v153 = vpop.f32.mrf.mxu0
  %154 = vdwg.mxu0
  %155 = vst [vmem:[#allocation3] sm:$0xff] %v117
  %156 = vst [vmem:[#allocation3 + $0x8] sm:$0xff] %v122
  %157 = vst [vmem:[#allocation3 + $0x10] sm:$0xff] %v127
  %158 = vst [vmem:[#allocation3 + $0x18] sm:$0xff] %v132
  %159 = vst [vmem:[#allocation3 + $0x20] sm:$0xff] %v137
  %160 = vst [vmem:[#allocation3 + $0x28] sm:$0xff] %v142
  %161 = vst [vmem:[#allocation3 + $0x30] sm:$0xff] %v147
  %162 = vst [vmem:[#allocation3 + $0x38] sm:$0xff] %v152
  %163 = vst [vmem:[#allocation2] sm:$0xff] 0.0
  %v164 = vld [vmem:[#allocation3] sm:$0xff]
  %v165 = vld [vmem:[#allocation2] sm:$0xff]
  %v166 = vld [vmem:[%s2] sm:$0xff]
  %v167 = vld [vmem:[%s2 + $0x8] sm:$0xff]
  %v168 = vld [vmem:[%s2 + $0x10] sm:$0xff]
  %v169 = vld [vmem:[%s2 + $0x18] sm:$0xff]
  %v170 = vld [vmem:[%s2 + $0x20] sm:$0xff]
  %v171 = vld [vmem:[%s2 + $0x28] sm:$0xff]
  %v172 = vld [vmem:[%s2 + $0x30] sm:$0xff]
  %v173 = vld [vmem:[%s2 + $0x38] sm:$0xff]
  %v174 = vld [vmem:[%s2 + $0x40] sm:$0xff]
  %v175 = vld [vmem:[%s2 + $0x48] sm:$0xff]
  %v176 = vld [vmem:[%s2 + $0x50] sm:$0xff]
  %v177 = vld [vmem:[%s2 + $0x58] sm:$0xff]
  %v178 = vld [vmem:[%s2 + $0x60] sm:$0xff]
  %v179 = vld [vmem:[%s2 + $0x68] sm:$0xff]
  %v180 = vld [vmem:[%s2 + $0x70] sm:$0xff]
  %v181 = vld [vmem:[%s2 + $0x78] sm:$0xff]
  %182 = vmatprep.subr.mxu0 0.0
  %183 = vmatpush1.msra.mxu0 %v181
  %184 = vmatprep.subr.mxu0 0.0
  %185 = vmatpush1.msra.mxu0 %v180
  %186 = vmatprep.subr.mxu0 0.0
  %187 = vmatpush1.msra.mxu0 %v179
  %188 = vmatprep.subr.mxu0 0.0
  %189 = vmatpush1.msra.mxu0 %v178
  %190 = vmatprep.subr.mxu0 0.0
  %191 = vmatpush1.msra.mxu0 %v177
  %192 = vmatprep.subr.mxu0 0.0
  %193 = vmatpush1.msra.mxu0 %v176
  %194 = vmatprep.subr.mxu0 0.0
  %195 = vmatpush1.msra.mxu0 %v175
  %196 = vmatprep.subr.mxu0 0.0
  %197 = vmatpush1.msra.mxu0 %v174
  %198 = vmatprep.subr.mxu0 0.0
  %199 = vmatpush1.msra.mxu0 %v173
  %200 = vmatprep.subr.mxu0 0.0
  %201 = vmatpush1.msra.mxu0 %v172
  %202 = vmatprep.subr.mxu0 0.0
  %203 = vmatpush1.msra.mxu0 %v171
  %204 = vmatprep.subr.mxu0 0.0
  %205 = vmatpush1.msra.mxu0 %v170
  %206 = vmatprep.subr.mxu0 0.0
  %207 = vmatpush1.msra.mxu0 %v169
  %208 = vmatprep.subr.mxu0 0.0
  %209 = vmatpush1.msra.mxu0 %v168
  %210 = vmatprep.subr.mxu0 0.0
  %211 = vmatpush1.msra.mxu0 %v167
  %212 = vmatprep.subr.mxu0 0.0
  %213 = vmatpush1.msra.mxu0 %v166
  %214 = vmatprep.subr.mxu0 0.0
  %215 = vmatpush2.msra.mxu0 0.0
  %216 = vmatprep.subr.mxu0 0.0
  %217 = vmatpush2.msra.mxu0 0.0
  %218 = vmatprep.subr.mxu0 0.0
  %219 = vmatpush2.msra.mxu0 0.0
  %220 = vmatprep.subr.mxu0 0.0
  %221 = vmatpush2.msra.mxu0 0.0
  %222 = vmatprep.subr.mxu0 0.0
  %223 = vmatpush2.msra.mxu0 0.0
  %224 = vmatprep.subr.mxu0 0.0
  %225 = vmatpush2.msra.mxu0 0.0
  %226 = vmatprep.subr.mxu0 0.0
  %227 = vmatpush2.msra.mxu0 0.0
  %228 = vmatprep.subr.mxu0 0.0
  %229 = vmatpush2.msra.mxu0 0.0
  %230 = vmatprep.subr.mxu0 0.0
  %231 = vmatpush2.msra.mxu0 0.0
  %232 = vmatprep.subr.mxu0 0.0
  %233 = vmatpush2.msra.mxu0 0.0
  %234 = vmatprep.subr.mxu0 0.0
  %235 = vmatpush2.msra.mxu0 0.0
  %236 = vmatprep.subr.mxu0 0.0
  %237 = vmatpush2.msra.mxu0 0.0
  %238 = vmatprep.subr.mxu0 0.0
  %239 = vmatpush2.msra.mxu0 0.0
  %240 = vmatprep.subr.mxu0 0.0
  %241 = vmatpush2.msra.mxu0 0.0
  %242 = vmatprep.subr.mxu0 0.0
  %243 = vmatpush2.msra.mxu0 0.0
  %244 = vmatprep.subr.mxu0 0.0
  %245 = vmatpush2.msra.mxu0 0.0
  %246 = vmatprep.mubr.f32.mxu0 0.0
  %247 = vmatmul.mubr.f32.gmra.mxu0 %v165
  %v248 = vpop.f32.mrf.mxu0
  %v249 = vadd.f32 0.0, %v248
  %v250 = vpop.f32.mrf.mxu0
  %251 = vdwg.mxu0
  %v252 = vadd.f32 %v164, %v249
  %v253 = vtanh.pop %v252
  %254 = vst [vmem:[#allocation2] sm:$0xff] %v253
  %255 = vst [vmem:[%s4] sm:$0xff] %v253
  %s256 = scalar_lea.vmem [#allocation3], 8
  %v257 = vld [vmem:[%s256] sm:$0xff]
  %v258 = vld [vmem:[#allocation2] sm:$0xff]
  %v259 = vld [vmem:[%s2] sm:$0xff]
  %v260 = vld [vmem:[%s2 + $0x8] sm:$0xff]
  %v261 = vld [vmem:[%s2 + $0x10] sm:$0xff]
  %v262 = vld [vmem:[%s2 + $0x18] sm:$0xff]
  %v263 = vld [vmem:[%s2 + $0x20] sm:$0xff]
  %v264 = vld [vmem:[%s2 + $0x28] sm:$0xff]
  %v265 = vld [vmem:[%s2 + $0x30] sm:$0xff]
  %v266 = vld [vmem:[%s2 + $0x38] sm:$0xff]
  %v267 = vld [vmem:[%s2 + $0x40] sm:$0xff]
  %v268 = vld [vmem:[%s2 + $0x48] sm:$0xff]
  %v269 = vld [vmem:[%s2 + $0x50] sm:$0xff]
  %v270 = vld [vmem:[%s2 + $0x58] sm:$0xff]
  %v271 = vld [vmem:[%s2 + $0x60] sm:$0xff]
  %v272 = vld [vmem:[%s2 + $0x68] sm:$0xff]
  %v273 = vld [vmem:[%s2 + $0x70] sm:$0xff]
  %v274 = vld [vmem:[%s2 + $0x78] sm:$0xff]
  %275 = vmatprep.subr.mxu0 0.0
  %276 = vmatpush1.msra.mxu0 %v274
  %277 = vmatprep.subr.mxu0 0.0
  %278 = vmatpush1.msra.mxu0 %v273
  %279 = vmatprep.subr.mxu0 0.0
  %280 = vmatpush1.msra.mxu0 %v272
  %281 = vmatprep.subr.mxu0 0.0
  %282 = vmatpush1.msra.mxu0 %v271
  %283 = vmatprep.subr.mxu0 0.0
  %284 = vmatpush1.msra.mxu0 %v270
  %285 = vmatprep.subr.mxu0 0.0
  %286 = vmatpush1.msra.mxu0 %v269
  %287 = vmatprep.subr.mxu0 0.0
  %288 = vmatpush1.msra.mxu0 %v268
  %289 = vmatprep.subr.mxu0 0.0
  %290 = vmatpush1.msra.mxu0 %v267
  %291 = vmatprep.subr.mxu0 0.0
  %292 = vmatpush1.msra.mxu0 %v266
  %293 = vmatprep.subr.mxu0 0.0
  %294 = vmatpush1.msra.mxu0 %v265
  %295 = vmatprep.subr.mxu0 0.0
  %296 = vmatpush1.msra.mxu0 %v264
  %297 = vmatprep.subr.mxu0 0.0
  %298 = vmatpush1.msra.mxu0 %v263
  %299 = vmatprep.subr.mxu0 0.0
  %300 = vmatpush1.msra.mxu0 %v262
  %301 = vmatprep.subr.mxu0 0.0
  %302 = vmatpush1.msra.mxu0 %v261
  %303 = vmatprep.subr.mxu0 0.0
  %304 = vmatpush1.msra.mxu0 %v260
  %305 = vmatprep.subr.mxu0 0.0
  %306 = vmatpush1.msra.mxu0 %v259
  %307 = vmatprep.subr.mxu0 0.0
  %308 = vmatpush2.msra.mxu0 0.0
  %309 = vmatprep.subr.mxu0 0.0
  %310 = vmatpush2.msra.mxu0 0.0
  %311 = vmatprep.subr.mxu0 0.0
  %312 = vmatpush2.msra.mxu0 0.0
  %313 = vmatprep.subr.mxu0 0.0
  %314 = vmatpush2.msra.mxu0 0.0
  %315 = vmatprep.subr.mxu0 0.0
  %316 = vmatpush2.msra.mxu0 0.0
  %317 = vmatprep.subr.mxu0 0.0
  %318 = vmatpush2.msra.mxu0 0.0
  %319 = vmatprep.subr.mxu0 0.0
  %320 = vmatpush2.msra.mxu0 0.0
  %321 = vmatprep.subr.mxu0 0.0
  %322 = vmatpush2.msra.mxu0 0.0
  %323 = vmatprep.subr.mxu0 0.0
  %324 = vmatpush2.msra.mxu0 0.0
  %325 = vmatprep.subr.mxu0 0.0
  %326 = vmatpush2.msra.mxu0 0.0
  %327 = vmatprep.subr.mxu0 0.0
  %328 = vmatpush2.msra.mxu0 0.0
  %329 = vmatprep.subr.mxu0 0.0
  %330 = vmatpush2.msra.mxu0 0.0
  %331 = vmatprep.subr.mxu0 0.0
  %332 = vmatpush2.msra.mxu0 0.0
  %333 = vmatprep.subr.mxu0 0.0
  %334 = vmatpush2.msra.mxu0 0.0
  %335 = vmatprep.subr.mxu0 0.0
  %336 = vmatpush2.msra.mxu0 0.0
  %337 = vmatprep.subr.mxu0 0.0
  %338 = vmatpush2.msra.mxu0 0.0
  %339 = vmatprep.mubr.f32.mxu0 0.0
  %340 = vmatmul.mubr.f32.gmra.mxu0 %v258
  %v341 = vpop.f32.mrf.mxu0
  %v342 = vadd.f32 0.0, %v341
  %v343 = vpop.f32.mrf.mxu0
  %344 = vdwg.mxu0
  %v345 = vadd.f32 %v257, %v342
  %v346 = vtanh.pop %v345
  %347 = vst [vmem:[#allocation2] sm:$0xff] %v346
  %s348 = scalar_lea.vmem %s4, 8
  %349 = vst [vmem:[%s348] sm:$0xff] %v346
  %s350 = scalar_lea.vmem [#allocation3], 16
  %v351 = vld [vmem:[%s350] sm:$0xff]
  %v352 = vld [vmem:[#allocation2] sm:$0xff]
  %v353 = vld [vmem:[%s2] sm:$0xff]
  %v354 = vld [vmem:[%s2 + $0x8] sm:$0xff]
  %v355 = vld [vmem:[%s2 + $0x10] sm:$0xff]
  %v356 = vld [vmem:[%s2 + $0x18] sm:$0xff]
  %v357 = vld [vmem:[%s2 + $0x20] sm:$0xff]
  %v358 = vld [vmem:[%s2 + $0x28] sm:$0xff]
  %v359 = vld [vmem:[%s2 + $0x30] sm:$0xff]
  %v360 = vld [vmem:[%s2 + $0x38] sm:$0xff]
  %v361 = vld [vmem:[%s2 + $0x40] sm:$0xff]
  %v362 = vld [vmem:[%s2 + $0x48] sm:$0xff]
  %v363 = vld [vmem:[%s2 + $0x50] sm:$0xff]
  %v364 = vld [vmem:[%s2 + $0x58] sm:$0xff]
  %v365 = vld [vmem:[%s2 + $0x60] sm:$0xff]
  %v366 = vld [vmem:[%s2 + $0x68] sm:$0xff]
  %v367 = vld [vmem:[%s2 + $0x70] sm:$0xff]
  %v368 = vld [vmem:[%s2 + $0x78] sm:$0xff]
  %369 = vmatprep.subr.mxu0 0.0
  %370 = vmatpush1.msra.mxu0 %v368
  %371 = vmatprep.subr.mxu0 0.0
  %372 = vmatpush1.msra.mxu0 %v367
  %373 = vmatprep.subr.mxu0 0.0
  %374 = vmatpush1.msra.mxu0 %v366
  %375 = vmatprep.subr.mxu0 0.0
  %376 = vmatpush1.msra.mxu0 %v365
  %377 = vmatprep.subr.mxu0 0.0
  %378 = vmatpush1.msra.mxu0 %v364
  %379 = vmatprep.subr.mxu0 0.0
  %380 = vmatpush1.msra.mxu0 %v363
  %381 = vmatprep.subr.mxu0 0.0
  %382 = vmatpush1.msra.mxu0 %v362
  %383 = vmatprep.subr.mxu0 0.0
  %384 = vmatpush1.msra.mxu0 %v361
  %385 = vmatprep.subr.mxu0 0.0
  %386 = vmatpush1.msra.mxu0 %v360
  %387 = vmatprep.subr.mxu0 0.0
  %388 = vmatpush1.msra.mxu0 %v359
  %389 = vmatprep.subr.mxu0 0.0
  %390 = vmatpush1.msra.mxu0 %v358
  %391 = vmatprep.subr.mxu0 0.0
  %392 = vmatpush1.msra.mxu0 %v357
  %393 = vmatprep.subr.mxu0 0.0
  %394 = vmatpush1.msra.mxu0 %v356
  %395 = vmatprep.subr.mxu0 0.0
  %396 = vmatpush1.msra.mxu0 %v355
  %397 = vmatprep.subr.mxu0 0.0
  %398 = vmatpush1.msra.mxu0 %v354
  %399 = vmatprep.subr.mxu0 0.0
  %400 = vmatpush1.msra.mxu0 %v353
  %401 = vmatprep.subr.mxu0 0.0
  %402 = vmatpush2.msra.mxu0 0.0
  %403 = vmatprep.subr.mxu0 0.0
  %404 = vmatpush2.msra.mxu0 0.0
  %405 = vmatprep.subr.mxu0 0.0
  %406 = vmatpush2.msra.mxu0 0.0
  %407 = vmatprep.subr.mxu0 0.0
  %408 = vmatpush2.msra.mxu0 0.0
  %409 = vmatprep.subr.mxu0 0.0
  %410 = vmatpush2.msra.mxu0 0.0
  %411 = vmatprep.subr.mxu0 0.0
  %412 = vmatpush2.msra.mxu0 0.0
  %413 = vmatprep.subr.mxu0 0.0
  %414 = vmatpush2.msra.mxu0 0.0
  %415 = vmatprep.subr.mxu0 0.0
  %416 = vmatpush2.msra.mxu0 0.0
  %417 = vmatprep.subr.mxu0 0.0
  %418 = vmatpush2.msra.mxu0 0.0
  %419 = vmatprep.subr.mxu0 0.0
  %420 = vmatpush2.msra.mxu0 0.0
  %421 = vmatprep.subr.mxu0 0.0
  %422 = vmatpush2.msra.mxu0 0.0
  %423 = vmatprep.subr.mxu0 0.0
  %424 = vmatpush2.msra.mxu0 0.0
  %425 = vmatprep.subr.mxu0 0.0
  %426 = vmatpush2.msra.mxu0 0.0
  %427 = vmatprep.subr.mxu0 0.0
  %428 = vmatpush2.msra.mxu0 0.0
  %429 = vmatprep.subr.mxu0 0.0
  %430 = vmatpush2.msra.mxu0 0.0
  %431 = vmatprep.subr.mxu0 0.0
  %432 = vmatpush2.msra.mxu0 0.0
  %433 = vmatprep.mubr.f32.mxu0 0.0
  %434 = vmatmul.mubr.f32.gmra.mxu0 %v352
  %v435 = vpop.f32.mrf.mxu0
  %v436 = vadd.f32 0.0, %v435
  %v437 = vpop.f32.mrf.mxu0
  %438 = vdwg.mxu0
  %v439 = vadd.f32 %v351, %v436
  %v440 = vtanh.pop %v439
  %441 = vst [vmem:[#allocation2] sm:$0xff] %v440
  %s442 = scalar_lea.vmem %s4, 16
  %443 = vst [vmem:[%s442] sm:$0xff] %v440
  %s444 = scalar_lea.vmem [#allocation3], 24
  %v445 = vld [vmem:[%s444] sm:$0xff]
  %v446 = vld [vmem:[#allocation2] sm:$0xff]
  %v447 = vld [vmem:[%s2] sm:$0xff]
  %v448 = vld [vmem:[%s2 + $0x8] sm:$0xff]
  %v449 = vld [vmem:[%s2 + $0x10] sm:$0xff]
  %v450 = vld [vmem:[%s2 + $0x18] sm:$0xff]
  %v451 = vld [vmem:[%s2 + $0x20] sm:$0xff]
  %v452 = vld [vmem:[%s2 + $0x28] sm:$0xff]
  %v453 = vld [vmem:[%s2 + $0x30] sm:$0xff]
  %v454 = vld [vmem:[%s2 + $0x38] sm:$0xff]
  %v455 = vld [vmem:[%s2 + $0x40] sm:$0xff]
  %v456 = vld [vmem:[%s2 + $0x48] sm:$0xff]
  %v457 = vld [vmem:[%s2 + $0x50] sm:$0xff]
  %v458 = vld [vmem:[%s2 + $0x58] sm:$0xff]
  %v459 = vld [vmem:[%s2 + $0x60] sm:$0xff]
  %v460 = vld [vmem:[%s2 + $0x68] sm:$0xff]
  %v461 = vld [vmem:[%s2 + $0x70] sm:$0xff]
  %v462 = vld [vmem:[%s2 + $0x78] sm:$0xff]
  %463 = vmatprep.subr.mxu0 0.0
  %464 = vmatpush1.msra.mxu0 %v462
  %465 = vmatprep.subr.mxu0 0.0
  %466 = vmatpush1.msra.mxu0 %v461
  %467 = vmatprep.subr.mxu0 0.0
  %468 = vmatpush1.msra.mxu0 %v460
  %469 = vmatprep.subr.mxu0 0.0
  %470 = vmatpush1.msra.mxu0 %v459
  %471 = vmatprep.subr.mxu0 0.0
  %472 = vmatpush1.msra.mxu0 %v458
  %473 = vmatprep.subr.mxu0 0.0
  %474 = vmatpush1.msra.mxu0 %v457
  %475 = vmatprep.subr.mxu0 0.0
  %476 = vmatpush1.msra.mxu0 %v456
  %477 = vmatprep.subr.mxu0 0.0
  %478 = vmatpush1.msra.mxu0 %v455
  %479 = vmatprep.subr.mxu0 0.0
  %480 = vmatpush1.msra.mxu0 %v454
  %481 = vmatprep.subr.mxu0 0.0
  %482 = vmatpush1.msra.mxu0 %v453
  %483 = vmatprep.subr.mxu0 0.0
  %484 = vmatpush1.msra.mxu0 %v452
  %485 = vmatprep.subr.mxu0 0.0
  %486 = vmatpush1.msra.mxu0 %v451
  %487 = vmatprep.subr.mxu0 0.0
  %488 = vmatpush1.msra.mxu0 %v450
  %489 = vmatprep.subr.mxu0 0.0
  %490 = vmatpush1.msra.mxu0 %v449
  %491 = vmatprep.subr.mxu0 0.0
  %492 = vmatpush1.msra.mxu0 %v448
  %493 = vmatprep.subr.mxu0 0.0
  %494 = vmatpush1.msra.mxu0 %v447
  %495 = vmatprep.subr.mxu0 0.0
  %496 = vmatpush2.msra.mxu0 0.0
  %497 = vmatprep.subr.mxu0 0.0
  %498 = vmatpush2.msra.mxu0 0.0
  %499 = vmatprep.subr.mxu0 0.0
  %500 = vmatpush2.msra.mxu0 0.0
  %501 = vmatprep.subr.mxu0 0.0
  %502 = vmatpush2.msra.mxu0 0.0
  %503 = vmatprep.subr.mxu0 0.0
  %504 = vmatpush2.msra.mxu0 0.0
  %505 = vmatprep.subr.mxu0 0.0
  %506 = vmatpush2.msra.mxu0 0.0
  %507 = vmatprep.subr.mxu0 0.0
  %508 = vmatpush2.msra.mxu0 0.0
  %509 = vmatprep.subr.mxu0 0.0
  %510 = vmatpush2.msra.mxu0 0.0
  %511 = vmatprep.subr.mxu0 0.0
  %512 = vmatpush2.msra.mxu0 0.0
  %513 = vmatprep.subr.mxu0 0.0
  %514 = vmatpush2.msra.mxu0 0.0
  %515 = vmatprep.subr.mxu0 0.0
  %516 = vmatpush2.msra.mxu0 0.0
  %517 = vmatprep.subr.mxu0 0.0
  %518 = vmatpush2.msra.mxu0 0.0
  %519 = vmatprep.subr.mxu0 0.0
  %520 = vmatpush2.msra.mxu0 0.0
  %521 = vmatprep.subr.mxu0 0.0
  %522 = vmatpush2.msra.mxu0 0.0
  %523 = vmatprep.subr.mxu0 0.0
  %524 = vmatpush2.msra.mxu0 0.0
  %525 = vmatprep.subr.mxu0 0.0
  %526 = vmatpush2.msra.mxu0 0.0
  %527 = vmatprep.mubr.f32.mxu0 0.0
  %528 = vmatmul.mubr.f32.gmra.mxu0 %v446
  %v529 = vpop.f32.mrf.mxu0
  %v530 = vadd.f32 0.0, %v529
  %v531 = vpop.f32.mrf.mxu0
  %532 = vdwg.mxu0
  %v533 = vadd.f32 %v445, %v530
  %v534 = vtanh.pop %v533
  %535 = vst [vmem:[#allocation2] sm:$0xff] %v534
  %s536 = scalar_lea.vmem %s4, 24
  %537 = vst [vmem:[%s536] sm:$0xff] %v534
  %s538 = scalar_lea.vmem [#allocation3], 32
  %v539 = vld [vmem:[%s538] sm:$0xff]
  %v540 = vld [vmem:[#allocation2] sm:$0xff]
  %v541 = vld [vmem:[%s2] sm:$0xff]
  %v542 = vld [vmem:[%s2 + $0x8] sm:$0xff]
  %v543 = vld [vmem:[%s2 + $0x10] sm:$0xff]
  %v544 = vld [vmem:[%s2 + $0x18] sm:$0xff]
  %v545 = vld [vmem:[%s2 + $0x20] sm:$0xff]
  %v546 = vld [vmem:[%s2 + $0x28] sm:$0xff]
  %v547 = vld [vmem:[%s2 + $0x30] sm:$0xff]
  %v548 = vld [vmem:[%s2 + $0x38] sm:$0xff]
  %v549 = vld [vmem:[%s2 + $0x40] sm:$0xff]
  %v550 = vld [vmem:[%s2 + $0x48] sm:$0xff]
  %v551 = vld [vmem:[%s2 + $0x50] sm:$0xff]
  %v552 = vld [vmem:[%s2 + $0x58] sm:$0xff]
  %v553 = vld [vmem:[%s2 + $0x60] sm:$0xff]
  %v554 = vld [vmem:[%s2 + $0x68] sm:$0xff]
  %v555 = vld [vmem:[%s2 + $0x70] sm:$0xff]
  %v556 = vld [vmem:[%s2 + $0x78] sm:$0xff]
  %557 = vmatprep.subr.mxu0 0.0
  %558 = vmatpush1.msra.mxu0 %v556
  %559 = vmatprep.subr.mxu0 0.0
  %560 = vmatpush1.msra.mxu0 %v555
  %561 = vmatprep.subr.mxu0 0.0
  %562 = vmatpush1.msra.mxu0 %v554
  %563 = vmatprep.subr.mxu0 0.0
  %564 = vmatpush1.msra.mxu0 %v553
  %565 = vmatprep.subr.mxu0 0.0
  %566 = vmatpush1.msra.mxu0 %v552
  %567 = vmatprep.subr.mxu0 0.0
  %568 = vmatpush1.msra.mxu0 %v551
  %569 = vmatprep.subr.mxu0 0.0
  %570 = vmatpush1.msra.mxu0 %v550
  %571 = vmatprep.subr.mxu0 0.0
  %572 = vmatpush1.msra.mxu0 %v549
  %573 = vmatprep.subr.mxu0 0.0
  %574 = vmatpush1.msra.mxu0 %v548
  %575 = vmatprep.subr.mxu0 0.0
  %576 = vmatpush1.msra.mxu0 %v547
  %577 = vmatprep.subr.mxu0 0.0
  %578 = vmatpush1.msra.mxu0 %v546
  %579 = vmatprep.subr.mxu0 0.0
  %580 = vmatpush1.msra.mxu0 %v545
  %581 = vmatprep.subr.mxu0 0.0
  %582 = vmatpush1.msra.mxu0 %v544
  %583 = vmatprep.subr.mxu0 0.0
  %584 = vmatpush1.msra.mxu0 %v543
  %585 = vmatprep.subr.mxu0 0.0
  %586 = vmatpush1.msra.mxu0 %v542
  %587 = vmatprep.subr.mxu0 0.0
  %588 = vmatpush1.msra.mxu0 %v541
  %589 = vmatprep.subr.mxu0 0.0
  %590 = vmatpush2.msra.mxu0 0.0
  %591 = vmatprep.subr.mxu0 0.0
  %592 = vmatpush2.msra.mxu0 0.0
  %593 = vmatprep.subr.mxu0 0.0
  %594 = vmatpush2.msra.mxu0 0.0
  %595 = vmatprep.subr.mxu0 0.0
  %596 = vmatpush2.msra.mxu0 0.0
  %597 = vmatprep.subr.mxu0 0.0
  %598 = vmatpush2.msra.mxu0 0.0
  %599 = vmatprep.subr.mxu0 0.0
  %600 = vmatpush2.msra.mxu0 0.0
  %601 = vmatprep.subr.mxu0 0.0
  %602 = vmatpush2.msra.mxu0 0.0
  %603 = vmatprep.subr.mxu0 0.0
  %604 = vmatpush2.msra.mxu0 0.0
  %605 = vmatprep.subr.mxu0 0.0
  %606 = vmatpush2.msra.mxu0 0.0
  %607 = vmatprep.subr.mxu0 0.0
  %608 = vmatpush2.msra.mxu0 0.0
  %609 = vmatprep.subr.mxu0 0.0
  %610 = vmatpush2.msra.mxu0 0.0
  %611 = vmatprep.subr.mxu0 0.0
  %612 = vmatpush2.msra.mxu0 0.0
  %613 = vmatprep.subr.mxu0 0.0
  %614 = vmatpush2.msra.mxu0 0.0
  %615 = vmatprep.subr.mxu0 0.0
  %616 = vmatpush2.msra.mxu0 0.0
  %617 = vmatprep.subr.mxu0 0.0
  %618 = vmatpush2.msra.mxu0 0.0
  %619 = vmatprep.subr.mxu0 0.0
  %620 = vmatpush2.msra.mxu0 0.0
  %621 = vmatprep.mubr.f32.mxu0 0.0
  %622 = vmatmul.mubr.f32.gmra.mxu0 %v540
  %v623 = vpop.f32.mrf.mxu0
  %v624 = vadd.f32 0.0, %v623
  %v625 = vpop.f32.mrf.mxu0
  %626 = vdwg.mxu0
  %v627 = vadd.f32 %v539, %v624
  %v628 = vtanh.pop %v627
  %629 = vst [vmem:[#allocation2] sm:$0xff] %v628
  %s630 = scalar_lea.vmem %s4, 32
  %631 = vst [vmem:[%s630] sm:$0xff] %v628
  %s632 = scalar_lea.vmem [#allocation3], 40
  %v633 = vld [vmem:[%s632] sm:$0xff]
  %v634 = vld [vmem:[#allocation2] sm:$0xff]
  %v635 = vld [vmem:[%s2] sm:$0xff]
  %v636 = vld [vmem:[%s2 + $0x8] sm:$0xff]
  %v637 = vld [vmem:[%s2 + $0x10] sm:$0xff]
  %v638 = vld [vmem:[%s2 + $0x18] sm:$0xff]
  %v639 = vld [vmem:[%s2 + $0x20] sm:$0xff]
  %v640 = vld [vmem:[%s2 + $0x28] sm:$0xff]
  %v641 = vld [vmem:[%s2 + $0x30] sm:$0xff]
  %v642 = vld [vmem:[%s2 + $0x38] sm:$0xff]
  %v643 = vld [vmem:[%s2 + $0x40] sm:$0xff]
  %v644 = vld [vmem:[%s2 + $0x48] sm:$0xff]
  %v645 = vld [vmem:[%s2 + $0x50] sm:$0xff]
  %v646 = vld [vmem:[%s2 + $0x58] sm:$0xff]
  %v647 = vld [vmem:[%s2 + $0x60] sm:$0xff]
  %v648 = vld [vmem:[%s2 + $0x68] sm:$0xff]
  %v649 = vld [vmem:[%s2 + $0x70] sm:$0xff]
  %v650 = vld [vmem:[%s2 + $0x78] sm:$0xff]
  %651 = vmatprep.subr.mxu0 0.0
  %652 = vmatpush1.msra.mxu0 %v650
  %653 = vmatprep.subr.mxu0 0.0
  %654 = vmatpush1.msra.mxu0 %v649
  %655 = vmatprep.subr.mxu0 0.0
  %656 = vmatpush1.msra.mxu0 %v648
  %657 = vmatprep.subr.mxu0 0.0
  %658 = vmatpush1.msra.mxu0 %v647
  %659 = vmatprep.subr.mxu0 0.0
  %660 = vmatpush1.msra.mxu0 %v646
  %661 = vmatprep.subr.mxu0 0.0
  %662 = vmatpush1.msra.mxu0 %v645
  %663 = vmatprep.subr.mxu0 0.0
  %664 = vmatpush1.msra.mxu0 %v644
  %665 = vmatprep.subr.mxu0 0.0
  %666 = vmatpush1.msra.mxu0 %v643
  %667 = vmatprep.subr.mxu0 0.0
  %668 = vmatpush1.msra.mxu0 %v642
  %669 = vmatprep.subr.mxu0 0.0
  %670 = vmatpush1.msra.mxu0 %v641
  %671 = vmatprep.subr.mxu0 0.0
  %672 = vmatpush1.msra.mxu0 %v640
  %673 = vmatprep.subr.mxu0 0.0
  %674 = vmatpush1.msra.mxu0 %v639
  %675 = vmatprep.subr.mxu0 0.0
  %676 = vmatpush1.msra.mxu0 %v638
  %677 = vmatprep.subr.mxu0 0.0
  %678 = vmatpush1.msra.mxu0 %v637
  %679 = vmatprep.subr.mxu0 0.0
  %680 = vmatpush1.msra.mxu0 %v636
  %681 = vmatprep.subr.mxu0 0.0
  %682 = vmatpush1.msra.mxu0 %v635
  %683 = vmatprep.subr.mxu0 0.0
  %684 = vmatpush2.msra.mxu0 0.0
  %685 = vmatprep.subr.mxu0 0.0
  %686 = vmatpush2.msra.mxu0 0.0
  %687 = vmatprep.subr.mxu0 0.0
  %688 = vmatpush2.msra.mxu0 0.0
  %689 = vmatprep.subr.mxu0 0.0
  %690 = vmatpush2.msra.mxu0 0.0
  %691 = vmatprep.subr.mxu0 0.0
  %692 = vmatpush2.msra.mxu0 0.0
  %693 = vmatprep.subr.mxu0 0.0
  %694 = vmatpush2.msra.mxu0 0.0
  %695 = vmatprep.subr.mxu0 0.0
  %696 = vmatpush2.msra.mxu0 0.0
  %697 = vmatprep.subr.mxu0 0.0
  %698 = vmatpush2.msra.mxu0 0.0
  %699 = vmatprep.subr.mxu0 0.0
  %700 = vmatpush2.msra.mxu0 0.0
  %701 = vmatprep.subr.mxu0 0.0
  %702 = vmatpush2.msra.mxu0 0.0
  %703 = vmatprep.subr.mxu0 0.0
  %704 = vmatpush2.msra.mxu0 0.0
  %705 = vmatprep.subr.mxu0 0.0
  %706 = vmatpush2.msra.mxu0 0.0
  %707 = vmatprep.subr.mxu0 0.0
  %708 = vmatpush2.msra.mxu0 0.0
  %709 = vmatprep.subr.mxu0 0.0
  %710 = vmatpush2.msra.mxu0 0.0
  %711 = vmatprep.subr.mxu0 0.0
  %712 = vmatpush2.msra.mxu0 0.0
  %713 = vmatprep.subr.mxu0 0.0
  %714 = vmatpush2.msra.mxu0 0.0
  %715 = vmatprep.mubr.f32.mxu0 0.0
  %716 = vmatmul.mubr.f32.gmra.mxu0 %v634
  %v717 = vpop.f32.mrf.mxu0
  %v718 = vadd.f32 0.0, %v717
  %v719 = vpop.f32.mrf.mxu0
  %720 = vdwg.mxu0
  %v721 = vadd.f32 %v633, %v718
  %v722 = vtanh.pop %v721
  %723 = vst [vmem:[#allocation2] sm:$0xff] %v722
  %s724 = scalar_lea.vmem %s4, 40
  %725 = vst [vmem:[%s724] sm:$0xff] %v722
  %s726 = scalar_lea.vmem [#allocation3], 48
  %v727 = vld [vmem:[%s726] sm:$0xff]
  %v728 = vld [vmem:[#allocation2] sm:$0xff]
  %v729 = vld [vmem:[%s2] sm:$0xff]
  %v730 = vld [vmem:[%s2 + $0x8] sm:$0xff]
  %v731 = vld [vmem:[%s2 + $0x10] sm:$0xff]
  %v732 = vld [vmem:[%s2 + $0x18] sm:$0xff]
  %v733 = vld [vmem:[%s2 + $0x20] sm:$0xff]
  %v734 = vld [vmem:[%s2 + $0x28] sm:$0xff]
  %v735 = vld [vmem:[%s2 + $0x30] sm:$0xff]
  %v736 = vld [vmem:[%s2 + $0x38] sm:$0xff]
  %v737 = vld [vmem:[%s2 + $0x40] sm:$0xff]
  %v738 = vld [vmem:[%s2 + $0x48] sm:$0xff]
  %v739 = vld [vmem:[%s2 + $0x50] sm:$0xff]
  %v740 = vld [vmem:[%s2 + $0x58] sm:$0xff]
  %v741 = vld [vmem:[%s2 + $0x60] sm:$0xff]
  %v742 = vld [vmem:[%s2 + $0x68] sm:$0xff]
  %v743 = vld [vmem:[%s2 + $0x70] sm:$0xff]
  %v744 = vld [vmem:[%s2 + $0x78] sm:$0xff]
  %745 = vmatprep.subr.mxu0 0.0
  %746 = vmatpush1.msra.mxu0 %v744
  %747 = vmatprep.subr.mxu0 0.0
  %748 = vmatpush1.msra.mxu0 %v743
  %749 = vmatprep.subr.mxu0 0.0
  %750 = vmatpush1.msra.mxu0 %v742
  %751 = vmatprep.subr.mxu0 0.0
  %752 = vmatpush1.msra.mxu0 %v741
  %753 = vmatprep.subr.mxu0 0.0
  %754 = vmatpush1.msra.mxu0 %v740
  %755 = vmatprep.subr.mxu0 0.0
  %756 = vmatpush1.msra.mxu0 %v739
  %757 = vmatprep.subr.mxu0 0.0
  %758 = vmatpush1.msra.mxu0 %v738
  %759 = vmatprep.subr.mxu0 0.0
  %760 = vmatpush1.msra.mxu0 %v737
  %761 = vmatprep.subr.mxu0 0.0
  %762 = vmatpush1.msra.mxu0 %v736
  %763 = vmatprep.subr.mxu0 0.0
  %764 = vmatpush1.msra.mxu0 %v735
  %765 = vmatprep.subr.mxu0 0.0
  %766 = vmatpush1.msra.mxu0 %v734
  %767 = vmatprep.subr.mxu0 0.0
  %768 = vmatpush1.msra.mxu0 %v733
  %769 = vmatprep.subr.mxu0 0.0
  %770 = vmatpush1.msra.mxu0 %v732
  %771 = vmatprep.subr.mxu0 0.0
  %772 = vmatpush1.msra.mxu0 %v731
  %773 = vmatprep.subr.mxu0 0.0
  %774 = vmatpush1.msra.mxu0 %v730
  %775 = vmatprep.subr.mxu0 0.0
  %776 = vmatpush1.msra.mxu0 %v729
  %777 = vmatprep.subr.mxu0 0.0
  %778 = vmatpush2.msra.mxu0 0.0
  %779 = vmatprep.subr.mxu0 0.0
  %780 = vmatpush2.msra.mxu0 0.0
  %781 = vmatprep.subr.mxu0 0.0
  %782 = vmatpush2.msra.mxu0 0.0
  %783 = vmatprep.subr.mxu0 0.0
  %784 = vmatpush2.msra.mxu0 0.0
  %785 = vmatprep.subr.mxu0 0.0
  %786 = vmatpush2.msra.mxu0 0.0
  %787 = vmatprep.subr.mxu0 0.0
  %788 = vmatpush2.msra.mxu0 0.0
  %789 = vmatprep.subr.mxu0 0.0
  %790 = vmatpush2.msra.mxu0 0.0
  %791 = vmatprep.subr.mxu0 0.0
  %792 = vmatpush2.msra.mxu0 0.0
  %793 = vmatprep.subr.mxu0 0.0
  %794 = vmatpush2.msra.mxu0 0.0
  %795 = vmatprep.subr.mxu0 0.0
  %796 = vmatpush2.msra.mxu0 0.0
  %797 = vmatprep.subr.mxu0 0.0
  %798 = vmatpush2.msra.mxu0 0.0
  %799 = vmatprep.subr.mxu0 0.0
  %800 = vmatpush2.msra.mxu0 0.0
  %801 = vmatprep.subr.mxu0 0.0
  %802 = vmatpush2.msra.mxu0 0.0
  %803 = vmatprep.subr.mxu0 0.0
  %804 = vmatpush2.msra.mxu0 0.0
  %805 = vmatprep.subr.mxu0 0.0
  %806 = vmatpush2.msra.mxu0 0.0
  %807 = vmatprep.subr.mxu0 0.0
  %808 = vmatpush2.msra.mxu0 0.0
  %809 = vmatprep.mubr.f32.mxu0 0.0
  %810 = vmatmul.mubr.f32.gmra.mxu0 %v728
  %v811 = vpop.f32.mrf.mxu0
  %v812 = vadd.f32 0.0, %v811
  %v813 = vpop.f32.mrf.mxu0
  %814 = vdwg.mxu0
  %v815 = vadd.f32 %v727, %v812
  %v816 = vtanh.pop %v815
  %817 = vst [vmem:[#allocation2] sm:$0xff] %v816
  %s818 = scalar_lea.vmem %s4, 48
  %819 = vst [vmem:[%s818] sm:$0xff] %v816
  %s820 = scalar_lea.vmem [#allocation3], 56
  %v821 = vld [vmem:[%s820] sm:$0xff]
  %v822 = vld [vmem:[#allocation2] sm:$0xff]
  %v823 = vld [vmem:[%s2] sm:$0xff]
  %v824 = vld [vmem:[%s2 + $0x8] sm:$0xff]
  %v825 = vld [vmem:[%s2 + $0x10] sm:$0xff]
  %v826 = vld [vmem:[%s2 + $0x18] sm:$0xff]
  %v827 = vld [vmem:[%s2 + $0x20] sm:$0xff]
  %v828 = vld [vmem:[%s2 + $0x28] sm:$0xff]
  %v829 = vld [vmem:[%s2 + $0x30] sm:$0xff]
  %v830 = vld [vmem:[%s2 + $0x38] sm:$0xff]
  %v831 = vld [vmem:[%s2 + $0x40] sm:$0xff]
  %v832 = vld [vmem:[%s2 + $0x48] sm:$0xff]
  %v833 = vld [vmem:[%s2 + $0x50] sm:$0xff]
  %v834 = vld [vmem:[%s2 + $0x58] sm:$0xff]
  %v835 = vld [vmem:[%s2 + $0x60] sm:$0xff]
  %v836 = vld [vmem:[%s2 + $0x68] sm:$0xff]
  %v837 = vld [vmem:[%s2 + $0x70] sm:$0xff]
  %v838 = vld [vmem:[%s2 + $0x78] sm:$0xff]
  %839 = vmatprep.subr.mxu0 0.0
  %840 = vmatpush1.msra.mxu0 %v838
  %841 = vmatprep.subr.mxu0 0.0
  %842 = vmatpush1.msra.mxu0 %v837
  %843 = vmatprep.subr.mxu0 0.0
  %844 = vmatpush1.msra.mxu0 %v836
  %845 = vmatprep.subr.mxu0 0.0
  %846 = vmatpush1.msra.mxu0 %v835
  %847 = vmatprep.subr.mxu0 0.0
  %848 = vmatpush1.msra.mxu0 %v834
  %849 = vmatprep.subr.mxu0 0.0
  %850 = vmatpush1.msra.mxu0 %v833
  %851 = vmatprep.subr.mxu0 0.0
  %852 = vmatpush1.msra.mxu0 %v832
  %853 = vmatprep.subr.mxu0 0.0
  %854 = vmatpush1.msra.mxu0 %v831
  %855 = vmatprep.subr.mxu0 0.0
  %856 = vmatpush1.msra.mxu0 %v830
  %857 = vmatprep.subr.mxu0 0.0
  %858 = vmatpush1.msra.mxu0 %v829
  %859 = vmatprep.subr.mxu0 0.0
  %860 = vmatpush1.msra.mxu0 %v828
  %861 = vmatprep.subr.mxu0 0.0
  %862 = vmatpush1.msra.mxu0 %v827
  %863 = vmatprep.subr.mxu0 0.0
  %864 = vmatpush1.msra.mxu0 %v826
  %865 = vmatprep.subr.mxu0 0.0
  %866 = vmatpush1.msra.mxu0 %v825
  %867 = vmatprep.subr.mxu0 0.0
  %868 = vmatpush1.msra.mxu0 %v824
  %869 = vmatprep.subr.mxu0 0.0
  %870 = vmatpush1.msra.mxu0 %v823
  %871 = vmatprep.subr.mxu0 0.0
  %872 = vmatpush2.msra.mxu0 0.0
  %873 = vmatprep.subr.mxu0 0.0
  %874 = vmatpush2.msra.mxu0 0.0
  %875 = vmatprep.subr.mxu0 0.0
  %876 = vmatpush2.msra.mxu0 0.0
  %877 = vmatprep.subr.mxu0 0.0
  %878 = vmatpush2.msra.mxu0 0.0
  %879 = vmatprep.subr.mxu0 0.0
  %880 = vmatpush2.msra.mxu0 0.0
  %881 = vmatprep.subr.mxu0 0.0
  %882 = vmatpush2.msra.mxu0 0.0
  %883 = vmatprep.subr.mxu0 0.0
  %884 = vmatpush2.msra.mxu0 0.0
  %885 = vmatprep.subr.mxu0 0.0
  %886 = vmatpush2.msra.mxu0 0.0
  %887 = vmatprep.subr.mxu0 0.0
  %888 = vmatpush2.msra.mxu0 0.0
  %889 = vmatprep.subr.mxu0 0.0
  %890 = vmatpush2.msra.mxu0 0.0
  %891 = vmatprep.subr.mxu0 0.0
  %892 = vmatpush2.msra.mxu0 0.0
  %893 = vmatprep.subr.mxu0 0.0
  %894 = vmatpush2.msra.mxu0 0.0
  %895 = vmatprep.subr.mxu0 0.0
  %896 = vmatpush2.msra.mxu0 0.0
  %897 = vmatprep.subr.mxu0 0.0
  %898 = vmatpush2.msra.mxu0 0.0
  %899 = vmatprep.subr.mxu0 0.0
  %900 = vmatpush2.msra.mxu0 0.0
  %901 = vmatprep.subr.mxu0 0.0
  %902 = vmatpush2.msra.mxu0 0.0
  %903 = vmatprep.mubr.f32.mxu0 0.0
  %904 = vmatmul.mubr.f32.gmra.mxu0 %v822
  %v905 = vpop.f32.mrf.mxu0
  %v906 = vadd.f32 0.0, %v905
  %v907 = vpop.f32.mrf.mxu0
  %908 = vdwg.mxu0
  %v909 = vadd.f32 %v821, %v906
  %v910 = vtanh.pop %v909
  %911 = vst [vmem:[#allocation2] sm:$0xff] %v910
  %s912 = scalar_lea.vmem %s4, 56
  %913 = vst [vmem:[%s912] sm:$0xff] %v910
  %v914 = vld [vmem:[#allocation2] sm:$0xff]
  %915 = vst [vmem:[%s5] sm:$0xff] %v914
  // Predicated region
  $region18: #{rnn_forward.4} parent=0 // pred_check
    _
  $region19: #{rnn_forward.4} parent=0 // pred_check_branch
    %917 = sbr.rel (0) target = $region21
  $region20: #{rnn_forward.4} parent=0 // pred_region
    _
  $region21: #{rnn_forward.4} parent=0 // pred_fallthru
    _
  // Predicated region
  $region22: #{rnn_forward.4} parent=0 // pred_check
    _
  $region23: #{rnn_forward.4} parent=0 // pred_check_branch
    %919 = sbr.rel (0) target = $region25
  $region24: #{rnn_forward.4} parent=0 // pred_region
    _
  $region25: #{rnn_forward.4} parent=0 // pred_fallthru
    _
  // Predicated region
  $region26: #{rnn_forward.4} parent=0 // pred_check
    _
  $region27: #{rnn_forward.4} parent=0 // pred_check_branch
    %921 = sbr.rel (0) target = $region29
  $region28: #{rnn_forward.4} parent=0 // pred_region
    _
  $region29: #{rnn_forward.4} parent=0 // pred_fallthru
    _
  // Predicated region
  $region30: #{rnn_forward.4} parent=0 // pred_check
    _
  $region31: #{rnn_forward.4} parent=0 // pred_check_branch
    %923 = sbr.rel (0) target = $region33
  $region32: #{rnn_forward.4} parent=0 // pred_region
    _
  $region33: #{rnn_forward.4} parent=0 // pred_fallthru
    _

// kernel: rnn_forward.3
$region0: #{rnn_forward.3}
  #allocation0 [shape = 'u32[]', space=smem, size = 0x4, offset = 0x4, fixed_abs, tag = 'smem constant byte address 0x4 - core index']
  #allocation1 [shape = 'u32[144,128]{1,0:T(1,128)}', space=vmem, size = 0x12000, scoped, tag = 'internal scratch']
  #allocation2 [shape = 'f32[8,128]{1,0:T(8,128)}', space=vmem, size = 0x1000, scoped, tag = 'scratch operand']
  #allocation3 [shape = 'f32[64,128]{1,0:T(8,128)}', space=vmem, size = 0x8000, scoped, tag = 'scratch operand']
  %s0 = inlined_call_operand.vmem [shape: f32[64,128], index: 0, kind: input, shape index: {}]
  %s1 = inlined_call_operand.hbm [shape: f32[128,128], index: 1, kind: input, shape index: {}]
  %s2 = inlined_call_operand.hbm [shape: f32[128,128], index: 2, kind: input, shape index: {}]
  %s3 = inlined_call_operand.vmem [shape: f32[1,128], index: 3, kind: input, shape index: {}]
  %s4 = inlined_call_operand.vmem [shape: f32[64,128], index: 4, kind: output, shape index: {0}]
  %s5 = inlined_call_operand.vmem [shape: f32[8,128], index: 5, kind: output, shape index: {1}]
  %6 = xla_tuple %s4, %s5
  %s7 = sld [smem:[#allocation0]]
  $region42: #{rnn_forward.3} parent=0
    _
  %s9 = ssub.s32 1, %s7
  %s10 = scalar_select 0, %s9, %s7
  $region1: #{rnn_forward.3} parent=0
    #allocation4 [shape = 'u8[65536]{0}', space=vmem, size = 0x10000, scoped, tag = 'input window, operand 1, single buffered']
    #allocation5 [shape = 's32[1]{0}', space=sflag, size = 0x4, scoped, tag = 'scoped memory for rnn_forward.3']
    #allocation6 [shape = 'u8[65536]{0}', space=vmem, size = 0x10000, scoped, tag = 'input window, operand 2, single buffered']
    #allocation7 [shape = 's32[1]{0}', space=sflag, size = 0x4, scoped, tag = 'scoped memory for rnn_forward.3']
    %11 = vsyncpa [#allocation5], 0
    %12 = vsyncpa [#allocation7], 0
    // Predicated region
    $region2: #{rnn_forward.3} parent=1 // pred_check
      _
    $region3: #{rnn_forward.3} parent=1 // pred_check_branch
      %14 = sbr.rel (0) target = $region5
    $region4: #{rnn_forward.3} parent=1 // pred_region
      _
    $region5: #{rnn_forward.3} parent=1 // pred_fallthru
      _
    // Predicated region
    $region6: #{rnn_forward.3} parent=1 // pred_check
      _
    $region7: #{rnn_forward.3} parent=1 // pred_check_branch
      %16 = sbr.rel (0) target = $region9
    $region8: #{rnn_forward.3} parent=1 // pred_region
      %s18 = ssub.s32 2048, 2048
      %19 = vsyncadd [#allocation5], %s18
      %s20 = sshll.u32 [#allocation4], 4
      %s21 = int_to_ptr.vmem [resolvable:$true] %s20
      %26 = dma.hbm_to_vmem [thread:$0]  %s1, 2048, %s21, [#allocation5], 128, 128, 8
    $region9: #{rnn_forward.3} parent=1 // pred_fallthru
      _
    // Predicated region
    $region10: #{rnn_forward.3} parent=1 // pred_check
      _
    $region11: #{rnn_forward.3} parent=1 // pred_check_branch
      %28 = sbr.rel (0) target = $region13
    $region12: #{rnn_forward.3} parent=1 // pred_region
      %s30 = ssub.s32 2048, 2048
      %31 = vsyncadd [#allocation7], %s30
      %s32 = sshll.u32 [#allocation6], 4
      %s33 = int_to_ptr.vmem [resolvable:$true] %s32
      %38 = dma.hbm_to_vmem [thread:$0]  %s2, 2048, %s33, [#allocation7], 128, 128, 8
    $region13: #{rnn_forward.3} parent=1 // pred_fallthru
      _
    // Predicated region
    $region14: #{rnn_forward.3} parent=1 // pred_check
      _
    $region15: #{rnn_forward.3} parent=1 // pred_check_branch
      %40 = sbr.rel (0) target = $region17
    $region16: #{rnn_forward.3} parent=1 // pred_region
      _
    $region17: #{rnn_forward.3} parent=1 // pred_fallthru
      _
    // Predicated region
    $region18: #{rnn_forward.3} parent=1 // pred_check
      _
    $region19: #{rnn_forward.3} parent=1 // pred_check_branch
      %42 = sbr.rel (0) target = $region21
    $region20: #{rnn_forward.3} parent=1 // pred_region
      %43 = dma.done [#allocation5], 2048
    $region21: #{rnn_forward.3} parent=1 // pred_fallthru
      _
    // Predicated region
    $region22: #{rnn_forward.3} parent=1 // pred_check
      _
    $region23: #{rnn_forward.3} parent=1 // pred_check_branch
      %45 = sbr.rel (0) target = $region25
    $region24: #{rnn_forward.3} parent=1 // pred_region
      %46 = dma.done [#allocation7], 2048
    $region25: #{rnn_forward.3} parent=1 // pred_fallthru
      _
    %v47 = vld [vmem:[%s0] sm:$0xff]
    %v48 = vld [vmem:[%s0 + $0x8] sm:$0xff]
    %v49 = vld [vmem:[%s0 + $0x10] sm:$0xff]
    %v50 = vld [vmem:[%s0 + $0x18] sm:$0xff]
    %v51 = vld [vmem:[%s0 + $0x20] sm:$0xff]
    %v52 = vld [vmem:[%s0 + $0x28] sm:$0xff]
    %v53 = vld [vmem:[%s0 + $0x30] sm:$0xff]
    %v54 = vld [vmem:[%s0 + $0x38] sm:$0xff]
    %v55 = vld [vmem:[#allocation4] sm:$0xff]
    %v56 = vld [vmem:[#allocation4 + $0x8] sm:$0xff]
    %v57 = vld [vmem:[#allocation4 + $0x10] sm:$0xff]
    %v58 = vld [vmem:[#allocation4 + $0x18] sm:$0xff]
    %v59 = vld [vmem:[#allocation4 + $0x20] sm:$0xff]
    %v60 = vld [vmem:[#allocation4 + $0x28] sm:$0xff]
    %v61 = vld [vmem:[#allocation4 + $0x30] sm:$0xff]
    %v62 = vld [vmem:[#allocation4 + $0x38] sm:$0xff]
    %v63 = vld [vmem:[#allocation4 + $0x40] sm:$0xff]
    %v64 = vld [vmem:[#allocation4 + $0x48] sm:$0xff]
    %v65 = vld [vmem:[#allocation4 + $0x50] sm:$0xff]
    %v66 = vld [vmem:[#allocation4 + $0x58] sm:$0xff]
    %v67 = vld [vmem:[#allocation4 + $0x60] sm:$0xff]
    %v68 = vld [vmem:[#allocation4 + $0x68] sm:$0xff]
    %v69 = vld [vmem:[#allocation4 + $0x70] sm:$0xff]
    %v70 = vld [vmem:[#allocation4 + $0x78] sm:$0xff]
    %v71 = vld [vmem:[%s3] sm:$0x1]
    %v73 = vlaneseq
    %v74 = vshrl.u32 %v73, 7
    %v75 = vsub.s32 0, %v74
    %v76 = vrot.slane %v71, %v75
    %78 = vmatprep.subr.mxu0 0.0
    %79 = vmatpush1.msra.mxu0 %v70
    %80 = vmatprep.subr.mxu0 0.0
    %81 = vmatpush1.msra.mxu0 %v69
    %82 = vmatprep.subr.mxu0 0.0
    %83 = vmatpush1.msra.mxu0 %v68
    %84 = vmatprep.subr.mxu0 0.0
    %85 = vmatpush1.msra.mxu0 %v67
    %86 = vmatprep.subr.mxu0 0.0
    %87 = vmatpush1.msra.mxu0 %v66
    %88 = vmatprep.subr.mxu0 0.0
    %89 = vmatpush1.msra.mxu0 %v65
    %90 = vmatprep.subr.mxu0 0.0
    %91 = vmatpush1.msra.mxu0 %v64
    %92 = vmatprep.subr.mxu0 0.0
    %93 = vmatpush1.msra.mxu0 %v63
    %94 = vmatprep.subr.mxu0 0.0
    %95 = vmatpush1.msra.mxu0 %v62
    %96 = vmatprep.subr.mxu0 0.0
    %97 = vmatpush1.msra.mxu0 %v61
    %98 = vmatprep.subr.mxu0 0.0
    %99 = vmatpush1.msra.mxu0 %v60
    %100 = vmatprep.subr.mxu0 0.0
    %101 = vmatpush1.msra.mxu0 %v59
    %102 = vmatprep.subr.mxu0 0.0
    %103 = vmatpush1.msra.mxu0 %v58
    %104 = vmatprep.subr.mxu0 0.0
    %105 = vmatpush1.msra.mxu0 %v57
    %106 = vmatprep.subr.mxu0 0.0
    %107 = vmatpush1.msra.mxu0 %v56
    %108 = vmatprep.subr.mxu0 0.0
    %109 = vmatpush1.msra.mxu0 %v55
    %110 = vmatprep.subr.mxu0 0.0
    %111 = vmatpush2.msra.mxu0 0.0
    %112 = vmatprep.subr.mxu0 0.0
    %113 = vmatpush2.msra.mxu0 0.0
    %114 = vmatprep.subr.mxu0 0.0
    %115 = vmatpush2.msra.mxu0 0.0
    %116 = vmatprep.subr.mxu0 0.0
    %117 = vmatpush2.msra.mxu0 0.0
    %118 = vmatprep.subr.mxu0 0.0
    %119 = vmatpush2.msra.mxu0 0.0
    %120 = vmatprep.subr.mxu0 0.0
    %121 = vmatpush2.msra.mxu0 0.0
    %122 = vmatprep.subr.mxu0 0.0
    %123 = vmatpush2.msra.mxu0 0.0
    %124 = vmatprep.subr.mxu0 0.0
    %125 = vmatpush2.msra.mxu0 0.0
    %126 = vmatprep.subr.mxu0 0.0
    %127 = vmatpush2.msra.mxu0 0.0
    %128 = vmatprep.subr.mxu0 0.0
    %129 = vmatpush2.msra.mxu0 0.0
    %130 = vmatprep.subr.mxu0 0.0
    %131 = vmatpush2.msra.mxu0 0.0
    %132 = vmatprep.subr.mxu0 0.0
    %133 = vmatpush2.msra.mxu0 0.0
    %134 = vmatprep.subr.mxu0 0.0
    %135 = vmatpush2.msra.mxu0 0.0
    %136 = vmatprep.subr.mxu0 0.0
    %137 = vmatpush2.msra.mxu0 0.0
    %138 = vmatprep.subr.mxu0 0.0
    %139 = vmatpush2.msra.mxu0 0.0
    %140 = vmatprep.subr.mxu0 0.0
    %141 = vmatpush2.msra.mxu0 0.0
    %142 = vmatprep.mubr.f32.mxu0 0.0
    %143 = vmatmul.mubr.f32.gmra.mxu0 %v47
    %v144 = vpop.f32.mrf.mxu0
    %v145 = vadd.f32 %v76, %v144
    %v146 = vpop.f32.mrf.mxu0
    %147 = vmatprep.mubr.f32.mxu0 0.0
    %148 = vmatmul.mubr.f32.gmra.mxu0 %v48
    %v149 = vpop.f32.mrf.mxu0
    %v150 = vadd.f32 %v76, %v149
    %v151 = vpop.f32.mrf.mxu0
    %152 = vmatprep.mubr.f32.mxu0 0.0
    %153 = vmatmul.mubr.f32.gmra.mxu0 %v49
    %v154 = vpop.f32.mrf.mxu0
    %v155 = vadd.f32 %v76, %v154
    %v156 = vpop.f32.mrf.mxu0
    %157 = vmatprep.mubr.f32.mxu0 0.0
    %158 = vmatmul.mubr.f32.gmra.mxu0 %v50
    %v159 = vpop.f32.mrf.mxu0
    %v160 = vadd.f32 %v76, %v159
    %v161 = vpop.f32.mrf.mxu0
    %162 = vmatprep.mubr.f32.mxu0 0.0
    %163 = vmatmul.mubr.f32.gmra.mxu0 %v51
    %v164 = vpop.f32.mrf.mxu0
    %v165 = vadd.f32 %v76, %v164
    %v166 = vpop.f32.mrf.mxu0
    %167 = vmatprep.mubr.f32.mxu0 0.0
    %168 = vmatmul.mubr.f32.gmra.mxu0 %v52
    %v169 = vpop.f32.mrf.mxu0
    %v170 = vadd.f32 %v76, %v169
    %v171 = vpop.f32.mrf.mxu0
    %172 = vmatprep.mubr.f32.mxu0 0.0
    %173 = vmatmul.mubr.f32.gmra.mxu0 %v53
    %v174 = vpop.f32.mrf.mxu0
    %v175 = vadd.f32 %v76, %v174
    %v176 = vpop.f32.mrf.mxu0
    %177 = vmatprep.mubr.f32.mxu0 0.0
    %178 = vmatmul.mubr.f32.gmra.mxu0 %v54
    %v179 = vpop.f32.mrf.mxu0
    %v180 = vadd.f32 %v76, %v179
    %v181 = vpop.f32.mrf.mxu0
    %182 = vdwg.mxu0
    %183 = vst [vmem:[#allocation3] sm:$0xff] %v145
    %184 = vst [vmem:[#allocation3 + $0x8] sm:$0xff] %v150
    %185 = vst [vmem:[#allocation3 + $0x10] sm:$0xff] %v155
    %186 = vst [vmem:[#allocation3 + $0x18] sm:$0xff] %v160
    %187 = vst [vmem:[#allocation3 + $0x20] sm:$0xff] %v165
    %188 = vst [vmem:[#allocation3 + $0x28] sm:$0xff] %v170
    %189 = vst [vmem:[#allocation3 + $0x30] sm:$0xff] %v175
    %190 = vst [vmem:[#allocation3 + $0x38] sm:$0xff] %v180
    %191 = vst [vmem:[#allocation2] sm:$0xff] 0.0
    %v192 = vld [vmem:[#allocation3] sm:$0xff]
    %v193 = vld [vmem:[#allocation2] sm:$0xff]
    %v194 = vld [vmem:[#allocation6] sm:$0xff]
    %v195 = vld [vmem:[#allocation6 + $0x8] sm:$0xff]
    %v196 = vld [vmem:[#allocation6 + $0x10] sm:$0xff]
    %v197 = vld [vmem:[#allocation6 + $0x18] sm:$0xff]
    %v198 = vld [vmem:[#allocation6 + $0x20] sm:$0xff]
    %v199 = vld [vmem:[#allocation6 + $0x28] sm:$0xff]
    %v200 = vld [vmem:[#allocation6 + $0x30] sm:$0xff]
    %v201 = vld [vmem:[#allocation6 + $0x38] sm:$0xff]
    %v202 = vld [vmem:[#allocation6 + $0x40] sm:$0xff]
    %v203 = vld [vmem:[#allocation6 + $0x48] sm:$0xff]
    %v204 = vld [vmem:[#allocation6 + $0x50] sm:$0xff]
    %v205 = vld [vmem:[#allocation6 + $0x58] sm:$0xff]
    %v206 = vld [vmem:[#allocation6 + $0x60] sm:$0xff]
    %v207 = vld [vmem:[#allocation6 + $0x68] sm:$0xff]
    %v208 = vld [vmem:[#allocation6 + $0x70] sm:$0xff]
    %v209 = vld [vmem:[#allocation6 + $0x78] sm:$0xff]
    %210 = vmatprep.subr.mxu0 0.0
    %211 = vmatpush1.msra.mxu0 %v209
    %212 = vmatprep.subr.mxu0 0.0
    %213 = vmatpush1.msra.mxu0 %v208
    %214 = vmatprep.subr.mxu0 0.0
    %215 = vmatpush1.msra.mxu0 %v207
    %216 = vmatprep.subr.mxu0 0.0
    %217 = vmatpush1.msra.mxu0 %v206
    %218 = vmatprep.subr.mxu0 0.0
    %219 = vmatpush1.msra.mxu0 %v205
    %220 = vmatprep.subr.mxu0 0.0
    %221 = vmatpush1.msra.mxu0 %v204
    %222 = vmatprep.subr.mxu0 0.0
    %223 = vmatpush1.msra.mxu0 %v203
    %224 = vmatprep.subr.mxu0 0.0
    %225 = vmatpush1.msra.mxu0 %v202
    %226 = vmatprep.subr.mxu0 0.0
    %227 = vmatpush1.msra.mxu0 %v201
    %228 = vmatprep.subr.mxu0 0.0
    %229 = vmatpush1.msra.mxu0 %v200
    %230 = vmatprep.subr.mxu0 0.0
    %231 = vmatpush1.msra.mxu0 %v199
    %232 = vmatprep.subr.mxu0 0.0
    %233 = vmatpush1.msra.mxu0 %v198
    %234 = vmatprep.subr.mxu0 0.0
    %235 = vmatpush1.msra.mxu0 %v197
    %236 = vmatprep.subr.mxu0 0.0
    %237 = vmatpush1.msra.mxu0 %v196
    %238 = vmatprep.subr.mxu0 0.0
    %239 = vmatpush1.msra.mxu0 %v195
    %240 = vmatprep.subr.mxu0 0.0
    %241 = vmatpush1.msra.mxu0 %v194
    %242 = vmatprep.subr.mxu0 0.0
    %243 = vmatpush2.msra.mxu0 0.0
    %244 = vmatprep.subr.mxu0 0.0
    %245 = vmatpush2.msra.mxu0 0.0
    %246 = vmatprep.subr.mxu0 0.0
    %247 = vmatpush2.msra.mxu0 0.0
    %248 = vmatprep.subr.mxu0 0.0
    %249 = vmatpush2.msra.mxu0 0.0
    %250 = vmatprep.subr.mxu0 0.0
    %251 = vmatpush2.msra.mxu0 0.0
    %252 = vmatprep.subr.mxu0 0.0
    %253 = vmatpush2.msra.mxu0 0.0
    %254 = vmatprep.subr.mxu0 0.0
    %255 = vmatpush2.msra.mxu0 0.0
    %256 = vmatprep.subr.mxu0 0.0
    %257 = vmatpush2.msra.mxu0 0.0
    %258 = vmatprep.subr.mxu0 0.0
    %259 = vmatpush2.msra.mxu0 0.0
    %260 = vmatprep.subr.mxu0 0.0
    %261 = vmatpush2.msra.mxu0 0.0
    %262 = vmatprep.subr.mxu0 0.0
    %263 = vmatpush2.msra.mxu0 0.0
    %264 = vmatprep.subr.mxu0 0.0
    %265 = vmatpush2.msra.mxu0 0.0
    %266 = vmatprep.subr.mxu0 0.0
    %267 = vmatpush2.msra.mxu0 0.0
    %268 = vmatprep.subr.mxu0 0.0
    %269 = vmatpush2.msra.mxu0 0.0
    %270 = vmatprep.subr.mxu0 0.0
    %271 = vmatpush2.msra.mxu0 0.0
    %272 = vmatprep.subr.mxu0 0.0
    %273 = vmatpush2.msra.mxu0 0.0
    %274 = vmatprep.mubr.f32.mxu0 0.0
    %275 = vmatmul.mubr.f32.gmra.mxu0 %v193
    %v276 = vpop.f32.mrf.mxu0
    %v277 = vadd.f32 0.0, %v276
    %v278 = vpop.f32.mrf.mxu0
    %279 = vdwg.mxu0
    %v280 = vadd.f32 %v192, %v277
    %v281 = vtanh.pop %v280
    %282 = vst [vmem:[#allocation2] sm:$0xff] %v281
    %283 = vst [vmem:[%s4] sm:$0xff] %v281
    %s284 = scalar_lea.vmem [#allocation3], 8
    %v285 = vld [vmem:[%s284] sm:$0xff]
    %v286 = vld [vmem:[#allocation2] sm:$0xff]
    %v287 = vld [vmem:[#allocation6] sm:$0xff]
    %v288 = vld [vmem:[#allocation6 + $0x8] sm:$0xff]
    %v289 = vld [vmem:[#allocation6 + $0x10] sm:$0xff]
    %v290 = vld [vmem:[#allocation6 + $0x18] sm:$0xff]
    %v291 = vld [vmem:[#allocation6 + $0x20] sm:$0xff]
    %v292 = vld [vmem:[#allocation6 + $0x28] sm:$0xff]
    %v293 = vld [vmem:[#allocation6 + $0x30] sm:$0xff]
    %v294 = vld [vmem:[#allocation6 + $0x38] sm:$0xff]
    %v295 = vld [vmem:[#allocation6 + $0x40] sm:$0xff]
    %v296 = vld [vmem:[#allocation6 + $0x48] sm:$0xff]
    %v297 = vld [vmem:[#allocation6 + $0x50] sm:$0xff]
    %v298 = vld [vmem:[#allocation6 + $0x58] sm:$0xff]
    %v299 = vld [vmem:[#allocation6 + $0x60] sm:$0xff]
    %v300 = vld [vmem:[#allocation6 + $0x68] sm:$0xff]
    %v301 = vld [vmem:[#allocation6 + $0x70] sm:$0xff]
    %v302 = vld [vmem:[#allocation6 + $0x78] sm:$0xff]
    %303 = vmatprep.subr.mxu0 0.0
    %304 = vmatpush1.msra.mxu0 %v302
    %305 = vmatprep.subr.mxu0 0.0
    %306 = vmatpush1.msra.mxu0 %v301
    %307 = vmatprep.subr.mxu0 0.0
    %308 = vmatpush1.msra.mxu0 %v300
    %309 = vmatprep.subr.mxu0 0.0
    %310 = vmatpush1.msra.mxu0 %v299
    %311 = vmatprep.subr.mxu0 0.0
    %312 = vmatpush1.msra.mxu0 %v298
    %313 = vmatprep.subr.mxu0 0.0
    %314 = vmatpush1.msra.mxu0 %v297
    %315 = vmatprep.subr.mxu0 0.0
    %316 = vmatpush1.msra.mxu0 %v296
    %317 = vmatprep.subr.mxu0 0.0
    %318 = vmatpush1.msra.mxu0 %v295
    %319 = vmatprep.subr.mxu0 0.0
    %320 = vmatpush1.msra.mxu0 %v294
    %321 = vmatprep.subr.mxu0 0.0
    %322 = vmatpush1.msra.mxu0 %v293
    %323 = vmatprep.subr.mxu0 0.0
    %324 = vmatpush1.msra.mxu0 %v292
    %325 = vmatprep.subr.mxu0 0.0
    %326 = vmatpush1.msra.mxu0 %v291
    %327 = vmatprep.subr.mxu0 0.0
    %328 = vmatpush1.msra.mxu0 %v290
    %329 = vmatprep.subr.mxu0 0.0
    %330 = vmatpush1.msra.mxu0 %v289
    %331 = vmatprep.subr.mxu0 0.0
    %332 = vmatpush1.msra.mxu0 %v288
    %333 = vmatprep.subr.mxu0 0.0
    %334 = vmatpush1.msra.mxu0 %v287
    %335 = vmatprep.subr.mxu0 0.0
    %336 = vmatpush2.msra.mxu0 0.0
    %337 = vmatprep.subr.mxu0 0.0
    %338 = vmatpush2.msra.mxu0 0.0
    %339 = vmatprep.subr.mxu0 0.0
    %340 = vmatpush2.msra.mxu0 0.0
    %341 = vmatprep.subr.mxu0 0.0
    %342 = vmatpush2.msra.mxu0 0.0
    %343 = vmatprep.subr.mxu0 0.0
    %344 = vmatpush2.msra.mxu0 0.0
    %345 = vmatprep.subr.mxu0 0.0
    %346 = vmatpush2.msra.mxu0 0.0
    %347 = vmatprep.subr.mxu0 0.0
    %348 = vmatpush2.msra.mxu0 0.0
    %349 = vmatprep.subr.mxu0 0.0
    %350 = vmatpush2.msra.mxu0 0.0
    %351 = vmatprep.subr.mxu0 0.0
    %352 = vmatpush2.msra.mxu0 0.0
    %353 = vmatprep.subr.mxu0 0.0
    %354 = vmatpush2.msra.mxu0 0.0
    %355 = vmatprep.subr.mxu0 0.0
    %356 = vmatpush2.msra.mxu0 0.0
    %357 = vmatprep.subr.mxu0 0.0
    %358 = vmatpush2.msra.mxu0 0.0
    %359 = vmatprep.subr.mxu0 0.0
    %360 = vmatpush2.msra.mxu0 0.0
    %361 = vmatprep.subr.mxu0 0.0
    %362 = vmatpush2.msra.mxu0 0.0
    %363 = vmatprep.subr.mxu0 0.0
    %364 = vmatpush2.msra.mxu0 0.0
    %365 = vmatprep.subr.mxu0 0.0
    %366 = vmatpush2.msra.mxu0 0.0
    %367 = vmatprep.mubr.f32.mxu0 0.0
    %368 = vmatmul.mubr.f32.gmra.mxu0 %v286
    %v369 = vpop.f32.mrf.mxu0
    %v370 = vadd.f32 0.0, %v369
    %v371 = vpop.f32.mrf.mxu0
    %372 = vdwg.mxu0
    %v373 = vadd.f32 %v285, %v370
    %v374 = vtanh.pop %v373
    %375 = vst [vmem:[#allocation2] sm:$0xff] %v374
    %s376 = scalar_lea.vmem %s4, 8
    %377 = vst [vmem:[%s376] sm:$0xff] %v374
    %s378 = scalar_lea.vmem [#allocation3], 16
    %v379 = vld [vmem:[%s378] sm:$0xff]
    %v380 = vld [vmem:[#allocation2] sm:$0xff]
    %v381 = vld [vmem:[#allocation6] sm:$0xff]
    %v382 = vld [vmem:[#allocation6 + $0x8] sm:$0xff]
    %v383 = vld [vmem:[#allocation6 + $0x10] sm:$0xff]
    %v384 = vld [vmem:[#allocation6 + $0x18] sm:$0xff]
    %v385 = vld [vmem:[#allocation6 + $0x20] sm:$0xff]
    %v386 = vld [vmem:[#allocation6 + $0x28] sm:$0xff]
    %v387 = vld [vmem:[#allocation6 + $0x30] sm:$0xff]
    %v388 = vld [vmem:[#allocation6 + $0x38] sm:$0xff]
    %v389 = vld [vmem:[#allocation6 + $0x40] sm:$0xff]
    %v390 = vld [vmem:[#allocation6 + $0x48] sm:$0xff]
    %v391 = vld [vmem:[#allocation6 + $0x50] sm:$0xff]
    %v392 = vld [vmem:[#allocation6 + $0x58] sm:$0xff]
    %v393 = vld [vmem:[#allocation6 + $0x60] sm:$0xff]
    %v394 = vld [vmem:[#allocation6 + $0x68] sm:$0xff]
    %v395 = vld [vmem:[#allocation6 + $0x70] sm:$0xff]
    %v396 = vld [vmem:[#allocation6 + $0x78] sm:$0xff]
    %397 = vmatprep.subr.mxu0 0.0
    %398 = vmatpush1.msra.mxu0 %v396
    %399 = vmatprep.subr.mxu0 0.0
    %400 = vmatpush1.msra.mxu0 %v395
    %401 = vmatprep.subr.mxu0 0.0
    %402 = vmatpush1.msra.mxu0 %v394
    %403 = vmatprep.subr.mxu0 0.0
    %404 = vmatpush1.msra.mxu0 %v393
    %405 = vmatprep.subr.mxu0 0.0
    %406 = vmatpush1.msra.mxu0 %v392
    %407 = vmatprep.subr.mxu0 0.0
    %408 = vmatpush1.msra.mxu0 %v391
    %409 = vmatprep.subr.mxu0 0.0
    %410 = vmatpush1.msra.mxu0 %v390
    %411 = vmatprep.subr.mxu0 0.0
    %412 = vmatpush1.msra.mxu0 %v389
    %413 = vmatprep.subr.mxu0 0.0
    %414 = vmatpush1.msra.mxu0 %v388
    %415 = vmatprep.subr.mxu0 0.0
    %416 = vmatpush1.msra.mxu0 %v387
    %417 = vmatprep.subr.mxu0 0.0
    %418 = vmatpush1.msra.mxu0 %v386
    %419 = vmatprep.subr.mxu0 0.0
    %420 = vmatpush1.msra.mxu0 %v385
    %421 = vmatprep.subr.mxu0 0.0
    %422 = vmatpush1.msra.mxu0 %v384
    %423 = vmatprep.subr.mxu0 0.0
    %424 = vmatpush1.msra.mxu0 %v383
    %425 = vmatprep.subr.mxu0 0.0
    %426 = vmatpush1.msra.mxu0 %v382
    %427 = vmatprep.subr.mxu0 0.0
    %428 = vmatpush1.msra.mxu0 %v381
    %429 = vmatprep.subr.mxu0 0.0
    %430 = vmatpush2.msra.mxu0 0.0
    %431 = vmatprep.subr.mxu0 0.0
    %432 = vmatpush2.msra.mxu0 0.0
    %433 = vmatprep.subr.mxu0 0.0
    %434 = vmatpush2.msra.mxu0 0.0
    %435 = vmatprep.subr.mxu0 0.0
    %436 = vmatpush2.msra.mxu0 0.0
    %437 = vmatprep.subr.mxu0 0.0
    %438 = vmatpush2.msra.mxu0 0.0
    %439 = vmatprep.subr.mxu0 0.0
    %440 = vmatpush2.msra.mxu0 0.0
    %441 = vmatprep.subr.mxu0 0.0
    %442 = vmatpush2.msra.mxu0 0.0
    %443 = vmatprep.subr.mxu0 0.0
    %444 = vmatpush2.msra.mxu0 0.0
    %445 = vmatprep.subr.mxu0 0.0
    %446 = vmatpush2.msra.mxu0 0.0
    %447 = vmatprep.subr.mxu0 0.0
    %448 = vmatpush2.msra.mxu0 0.0
    %449 = vmatprep.subr.mxu0 0.0
    %450 = vmatpush2.msra.mxu0 0.0
    %451 = vmatprep.subr.mxu0 0.0
    %452 = vmatpush2.msra.mxu0 0.0
    %453 = vmatprep.subr.mxu0 0.0
    %454 = vmatpush2.msra.mxu0 0.0
    %455 = vmatprep.subr.mxu0 0.0
    %456 = vmatpush2.msra.mxu0 0.0
    %457 = vmatprep.subr.mxu0 0.0
    %458 = vmatpush2.msra.mxu0 0.0
    %459 = vmatprep.subr.mxu0 0.0
    %460 = vmatpush2.msra.mxu0 0.0
    %461 = vmatprep.mubr.f32.mxu0 0.0
    %462 = vmatmul.mubr.f32.gmra.mxu0 %v380
    %v463 = vpop.f32.mrf.mxu0
    %v464 = vadd.f32 0.0, %v463
    %v465 = vpop.f32.mrf.mxu0
    %466 = vdwg.mxu0
    %v467 = vadd.f32 %v379, %v464
    %v468 = vtanh.pop %v467
    %469 = vst [vmem:[#allocation2] sm:$0xff] %v468
    %s470 = scalar_lea.vmem %s4, 16
    %471 = vst [vmem:[%s470] sm:$0xff] %v468
    %s472 = scalar_lea.vmem [#allocation3], 24
    %v473 = vld [vmem:[%s472] sm:$0xff]
    %v474 = vld [vmem:[#allocation2] sm:$0xff]
    %v475 = vld [vmem:[#allocation6] sm:$0xff]
    %v476 = vld [vmem:[#allocation6 + $0x8] sm:$0xff]
    %v477 = vld [vmem:[#allocation6 + $0x10] sm:$0xff]
    %v478 = vld [vmem:[#allocation6 + $0x18] sm:$0xff]
    %v479 = vld [vmem:[#allocation6 + $0x20] sm:$0xff]
    %v480 = vld [vmem:[#allocation6 + $0x28] sm:$0xff]
    %v481 = vld [vmem:[#allocation6 + $0x30] sm:$0xff]
    %v482 = vld [vmem:[#allocation6 + $0x38] sm:$0xff]
    %v483 = vld [vmem:[#allocation6 + $0x40] sm:$0xff]
    %v484 = vld [vmem:[#allocation6 + $0x48] sm:$0xff]
    %v485 = vld [vmem:[#allocation6 + $0x50] sm:$0xff]
    %v486 = vld [vmem:[#allocation6 + $0x58] sm:$0xff]
    %v487 = vld [vmem:[#allocation6 + $0x60] sm:$0xff]
    %v488 = vld [vmem:[#allocation6 + $0x68] sm:$0xff]
    %v489 = vld [vmem:[#allocation6 + $0x70] sm:$0xff]
    %v490 = vld [vmem:[#allocation6 + $0x78] sm:$0xff]
    %491 = vmatprep.subr.mxu0 0.0
    %492 = vmatpush1.msra.mxu0 %v490
    %493 = vmatprep.subr.mxu0 0.0
    %494 = vmatpush1.msra.mxu0 %v489
    %495 = vmatprep.subr.mxu0 0.0
    %496 = vmatpush1.msra.mxu0 %v488
    %497 = vmatprep.subr.mxu0 0.0
    %498 = vmatpush1.msra.mxu0 %v487
    %499 = vmatprep.subr.mxu0 0.0
    %500 = vmatpush1.msra.mxu0 %v486
    %501 = vmatprep.subr.mxu0 0.0
    %502 = vmatpush1.msra.mxu0 %v485
    %503 = vmatprep.subr.mxu0 0.0
    %504 = vmatpush1.msra.mxu0 %v484
    %505 = vmatprep.subr.mxu0 0.0
    %506 = vmatpush1.msra.mxu0 %v483
    %507 = vmatprep.subr.mxu0 0.0
    %508 = vmatpush1.msra.mxu0 %v482
    %509 = vmatprep.subr.mxu0 0.0
    %510 = vmatpush1.msra.mxu0 %v481
    %511 = vmatprep.subr.mxu0 0.0
    %512 = vmatpush1.msra.mxu0 %v480
    %513 = vmatprep.subr.mxu0 0.0
    %514 = vmatpush1.msra.mxu0 %v479
    %515 = vmatprep.subr.mxu0 0.0
    %516 = vmatpush1.msra.mxu0 %v478
    %517 = vmatprep.subr.mxu0 0.0
    %518 = vmatpush1.msra.mxu0 %v477
    %519 = vmatprep.subr.mxu0 0.0
    %520 = vmatpush1.msra.mxu0 %v476
    %521 = vmatprep.subr.mxu0 0.0
    %522 = vmatpush1.msra.mxu0 %v475
    %523 = vmatprep.subr.mxu0 0.0
    %524 = vmatpush2.msra.mxu0 0.0
    %525 = vmatprep.subr.mxu0 0.0
    %526 = vmatpush2.msra.mxu0 0.0
    %527 = vmatprep.subr.mxu0 0.0
    %528 = vmatpush2.msra.mxu0 0.0
    %529 = vmatprep.subr.mxu0 0.0
    %530 = vmatpush2.msra.mxu0 0.0
    %531 = vmatprep.subr.mxu0 0.0
    %532 = vmatpush2.msra.mxu0 0.0
    %533 = vmatprep.subr.mxu0 0.0
    %534 = vmatpush2.msra.mxu0 0.0
    %535 = vmatprep.subr.mxu0 0.0
    %536 = vmatpush2.msra.mxu0 0.0
    %537 = vmatprep.subr.mxu0 0.0
    %538 = vmatpush2.msra.mxu0 0.0
    %539 = vmatprep.subr.mxu0 0.0
    %540 = vmatpush2.msra.mxu0 0.0
    %541 = vmatprep.subr.mxu0 0.0
    %542 = vmatpush2.msra.mxu0 0.0
    %543 = vmatprep.subr.mxu0 0.0
    %544 = vmatpush2.msra.mxu0 0.0
    %545 = vmatprep.subr.mxu0 0.0
    %546 = vmatpush2.msra.mxu0 0.0
    %547 = vmatprep.subr.mxu0 0.0
    %548 = vmatpush2.msra.mxu0 0.0
    %549 = vmatprep.subr.mxu0 0.0
    %550 = vmatpush2.msra.mxu0 0.0
    %551 = vmatprep.subr.mxu0 0.0
    %552 = vmatpush2.msra.mxu0 0.0
    %553 = vmatprep.subr.mxu0 0.0
    %554 = vmatpush2.msra.mxu0 0.0
    %555 = vmatprep.mubr.f32.mxu0 0.0
    %556 = vmatmul.mubr.f32.gmra.mxu0 %v474
    %v557 = vpop.f32.mrf.mxu0
    %v558 = vadd.f32 0.0, %v557
    %v559 = vpop.f32.mrf.mxu0
    %560 = vdwg.mxu0
    %v561 = vadd.f32 %v473, %v558
    %v562 = vtanh.pop %v561
    %563 = vst [vmem:[#allocation2] sm:$0xff] %v562
    %s564 = scalar_lea.vmem %s4, 24
    %565 = vst [vmem:[%s564] sm:$0xff] %v562
    %s566 = scalar_lea.vmem [#allocation3], 32
    %v567 = vld [vmem:[%s566] sm:$0xff]
    %v568 = vld [vmem:[#allocation2] sm:$0xff]
    %v569 = vld [vmem:[#allocation6] sm:$0xff]
    %v570 = vld [vmem:[#allocation6 + $0x8] sm:$0xff]
    %v571 = vld [vmem:[#allocation6 + $0x10] sm:$0xff]
    %v572 = vld [vmem:[#allocation6 + $0x18] sm:$0xff]
    %v573 = vld [vmem:[#allocation6 + $0x20] sm:$0xff]
    %v574 = vld [vmem:[#allocation6 + $0x28] sm:$0xff]
    %v575 = vld [vmem:[#allocation6 + $0x30] sm:$0xff]
    %v576 = vld [vmem:[#allocation6 + $0x38] sm:$0xff]
    %v577 = vld [vmem:[#allocation6 + $0x40] sm:$0xff]
    %v578 = vld [vmem:[#allocation6 + $0x48] sm:$0xff]
    %v579 = vld [vmem:[#allocation6 + $0x50] sm:$0xff]
    %v580 = vld [vmem:[#allocation6 + $0x58] sm:$0xff]
    %v581 = vld [vmem:[#allocation6 + $0x60] sm:$0xff]
    %v582 = vld [vmem:[#allocation6 + $0x68] sm:$0xff]
    %v583 = vld [vmem:[#allocation6 + $0x70] sm:$0xff]
    %v584 = vld [vmem:[#allocation6 + $0x78] sm:$0xff]
    %585 = vmatprep.subr.mxu0 0.0
    %586 = vmatpush1.msra.mxu0 %v584
    %587 = vmatprep.subr.mxu0 0.0
    %588 = vmatpush1.msra.mxu0 %v583
    %589 = vmatprep.subr.mxu0 0.0
    %590 = vmatpush1.msra.mxu0 %v582
    %591 = vmatprep.subr.mxu0 0.0
    %592 = vmatpush1.msra.mxu0 %v581
    %593 = vmatprep.subr.mxu0 0.0
    %594 = vmatpush1.msra.mxu0 %v580
    %595 = vmatprep.subr.mxu0 0.0
    %596 = vmatpush1.msra.mxu0 %v579
    %597 = vmatprep.subr.mxu0 0.0
    %598 = vmatpush1.msra.mxu0 %v578
    %599 = vmatprep.subr.mxu0 0.0
    %600 = vmatpush1.msra.mxu0 %v577
    %601 = vmatprep.subr.mxu0 0.0
    %602 = vmatpush1.msra.mxu0 %v576
    %603 = vmatprep.subr.mxu0 0.0
    %604 = vmatpush1.msra.mxu0 %v575
    %605 = vmatprep.subr.mxu0 0.0
    %606 = vmatpush1.msra.mxu0 %v574
    %607 = vmatprep.subr.mxu0 0.0
    %608 = vmatpush1.msra.mxu0 %v573
    %609 = vmatprep.subr.mxu0 0.0
    %610 = vmatpush1.msra.mxu0 %v572
    %611 = vmatprep.subr.mxu0 0.0
    %612 = vmatpush1.msra.mxu0 %v571
    %613 = vmatprep.subr.mxu0 0.0
    %614 = vmatpush1.msra.mxu0 %v570
    %615 = vmatprep.subr.mxu0 0.0
    %616 = vmatpush1.msra.mxu0 %v569
    %617 = vmatprep.subr.mxu0 0.0
    %618 = vmatpush2.msra.mxu0 0.0
    %619 = vmatprep.subr.mxu0 0.0
    %620 = vmatpush2.msra.mxu0 0.0
    %621 = vmatprep.subr.mxu0 0.0
    %622 = vmatpush2.msra.mxu0 0.0
    %623 = vmatprep.subr.mxu0 0.0
    %624 = vmatpush2.msra.mxu0 0.0
    %625 = vmatprep.subr.mxu0 0.0
    %626 = vmatpush2.msra.mxu0 0.0
    %627 = vmatprep.subr.mxu0 0.0
    %628 = vmatpush2.msra.mxu0 0.0
    %629 = vmatprep.subr.mxu0 0.0
    %630 = vmatpush2.msra.mxu0 0.0
    %631 = vmatprep.subr.mxu0 0.0
    %632 = vmatpush2.msra.mxu0 0.0
    %633 = vmatprep.subr.mxu0 0.0
    %634 = vmatpush2.msra.mxu0 0.0
    %635 = vmatprep.subr.mxu0 0.0
    %636 = vmatpush2.msra.mxu0 0.0
    %637 = vmatprep.subr.mxu0 0.0
    %638 = vmatpush2.msra.mxu0 0.0
    %639 = vmatprep.subr.mxu0 0.0
    %640 = vmatpush2.msra.mxu0 0.0
    %641 = vmatprep.subr.mxu0 0.0
    %642 = vmatpush2.msra.mxu0 0.0
    %643 = vmatprep.subr.mxu0 0.0
    %644 = vmatpush2.msra.mxu0 0.0
    %645 = vmatprep.subr.mxu0 0.0
    %646 = vmatpush2.msra.mxu0 0.0
    %647 = vmatprep.subr.mxu0 0.0
    %648 = vmatpush2.msra.mxu0 0.0
    %649 = vmatprep.mubr.f32.mxu0 0.0
    %650 = vmatmul.mubr.f32.gmra.mxu0 %v568
    %v651 = vpop.f32.mrf.mxu0
    %v652 = vadd.f32 0.0, %v651
    %v653 = vpop.f32.mrf.mxu0
    %654 = vdwg.mxu0
    %v655 = vadd.f32 %v567, %v652
    %v656 = vtanh.pop %v655
    %657 = vst [vmem:[#allocation2] sm:$0xff] %v656
    %s658 = scalar_lea.vmem %s4, 32
    %659 = vst [vmem:[%s658] sm:$0xff] %v656
    %s660 = scalar_lea.vmem [#allocation3], 40
    %v661 = vld [vmem:[%s660] sm:$0xff]
    %v662 = vld [vmem:[#allocation2] sm:$0xff]
    %v663 = vld [vmem:[#allocation6] sm:$0xff]
    %v664 = vld [vmem:[#allocation6 + $0x8] sm:$0xff]
    %v665 = vld [vmem:[#allocation6 + $0x10] sm:$0xff]
    %v666 = vld [vmem:[#allocation6 + $0x18] sm:$0xff]
    %v667 = vld [vmem:[#allocation6 + $0x20] sm:$0xff]
    %v668 = vld [vmem:[#allocation6 + $0x28] sm:$0xff]
    %v669 = vld [vmem:[#allocation6 + $0x30] sm:$0xff]
    %v670 = vld [vmem:[#allocation6 + $0x38] sm:$0xff]
    %v671 = vld [vmem:[#allocation6 + $0x40] sm:$0xff]
    %v672 = vld [vmem:[#allocation6 + $0x48] sm:$0xff]
    %v673 = vld [vmem:[#allocation6 + $0x50] sm:$0xff]
    %v674 = vld [vmem:[#allocation6 + $0x58] sm:$0xff]
    %v675 = vld [vmem:[#allocation6 + $0x60] sm:$0xff]
    %v676 = vld [vmem:[#allocation6 + $0x68] sm:$0xff]
    %v677 = vld [vmem:[#allocation6 + $0x70] sm:$0xff]
    %v678 = vld [vmem:[#allocation6 + $0x78] sm:$0xff]
    %679 = vmatprep.subr.mxu0 0.0
    %680 = vmatpush1.msra.mxu0 %v678
    %681 = vmatprep.subr.mxu0 0.0
    %682 = vmatpush1.msra.mxu0 %v677
    %683 = vmatprep.subr.mxu0 0.0
    %684 = vmatpush1.msra.mxu0 %v676
    %685 = vmatprep.subr.mxu0 0.0
    %686 = vmatpush1.msra.mxu0 %v675
    %687 = vmatprep.subr.mxu0 0.0
    %688 = vmatpush1.msra.mxu0 %v674
    %689 = vmatprep.subr.mxu0 0.0
    %690 = vmatpush1.msra.mxu0 %v673
    %691 = vmatprep.subr.mxu0 0.0
    %692 = vmatpush1.msra.mxu0 %v672
    %693 = vmatprep.subr.mxu0 0.0
    %694 = vmatpush1.msra.mxu0 %v671
    %695 = vmatprep.subr.mxu0 0.0
    %696 = vmatpush1.msra.mxu0 %v670
    %697 = vmatprep.subr.mxu0 0.0
    %698 = vmatpush1.msra.mxu0 %v669
    %699 = vmatprep.subr.mxu0 0.0
    %700 = vmatpush1.msra.mxu0 %v668
    %701 = vmatprep.subr.mxu0 0.0
    %702 = vmatpush1.msra.mxu0 %v667
    %703 = vmatprep.subr.mxu0 0.0
    %704 = vmatpush1.msra.mxu0 %v666
    %705 = vmatprep.subr.mxu0 0.0
    %706 = vmatpush1.msra.mxu0 %v665
    %707 = vmatprep.subr.mxu0 0.0
    %708 = vmatpush1.msra.mxu0 %v664
    %709 = vmatprep.subr.mxu0 0.0
    %710 = vmatpush1.msra.mxu0 %v663
    %711 = vmatprep.subr.mxu0 0.0
    %712 = vmatpush2.msra.mxu0 0.0
    %713 = vmatprep.subr.mxu0 0.0
    %714 = vmatpush2.msra.mxu0 0.0
    %715 = vmatprep.subr.mxu0 0.0
    %716 = vmatpush2.msra.mxu0 0.0
    %717 = vmatprep.subr.mxu0 0.0
    %718 = vmatpush2.msra.mxu0 0.0
    %719 = vmatprep.subr.mxu0 0.0
    %720 = vmatpush2.msra.mxu0 0.0
    %721 = vmatprep.subr.mxu0 0.0
    %722 = vmatpush2.msra.mxu0 0.0
    %723 = vmatprep.subr.mxu0 0.0
    %724 = vmatpush2.msra.mxu0 0.0
    %725 = vmatprep.subr.mxu0 0.0
    %726 = vmatpush2.msra.mxu0 0.0
    %727 = vmatprep.subr.mxu0 0.0
    %728 = vmatpush2.msra.mxu0 0.0
    %729 = vmatprep.subr.mxu0 0.0
    %730 = vmatpush2.msra.mxu0 0.0
    %731 = vmatprep.subr.mxu0 0.0
    %732 = vmatpush2.msra.mxu0 0.0
    %733 = vmatprep.subr.mxu0 0.0
    %734 = vmatpush2.msra.mxu0 0.0
    %735 = vmatprep.subr.mxu0 0.0
    %736 = vmatpush2.msra.mxu0 0.0
    %737 = vmatprep.subr.mxu0 0.0
    %738 = vmatpush2.msra.mxu0 0.0
    %739 = vmatprep.subr.mxu0 0.0
    %740 = vmatpush2.msra.mxu0 0.0
    %741 = vmatprep.subr.mxu0 0.0
    %742 = vmatpush2.msra.mxu0 0.0
    %743 = vmatprep.mubr.f32.mxu0 0.0
    %744 = vmatmul.mubr.f32.gmra.mxu0 %v662
    %v745 = vpop.f32.mrf.mxu0
    %v746 = vadd.f32 0.0, %v745
    %v747 = vpop.f32.mrf.mxu0
    %748 = vdwg.mxu0
    %v749 = vadd.f32 %v661, %v746
    %v750 = vtanh.pop %v749
    %751 = vst [vmem:[#allocation2] sm:$0xff] %v750
    %s752 = scalar_lea.vmem %s4, 40
    %753 = vst [vmem:[%s752] sm:$0xff] %v750
    %s754 = scalar_lea.vmem [#allocation3], 48
    %v755 = vld [vmem:[%s754] sm:$0xff]
    %v756 = vld [vmem:[#allocation2] sm:$0xff]
    %v757 = vld [vmem:[#allocation6] sm:$0xff]
    %v758 = vld [vmem:[#allocation6 + $0x8] sm:$0xff]
    %v759 = vld [vmem:[#allocation6 + $0x10] sm:$0xff]
    %v760 = vld [vmem:[#allocation6 + $0x18] sm:$0xff]
    %v761 = vld [vmem:[#allocation6 + $0x20] sm:$0xff]
    %v762 = vld [vmem:[#allocation6 + $0x28] sm:$0xff]
    %v763 = vld [vmem:[#allocation6 + $0x30] sm:$0xff]
    %v764 = vld [vmem:[#allocation6 + $0x38] sm:$0xff]
    %v765 = vld [vmem:[#allocation6 + $0x40] sm:$0xff]
    %v766 = vld [vmem:[#allocation6 + $0x48] sm:$0xff]
    %v767 = vld [vmem:[#allocation6 + $0x50] sm:$0xff]
    %v768 = vld [vmem:[#allocation6 + $0x58] sm:$0xff]
    %v769 = vld [vmem:[#allocation6 + $0x60] sm:$0xff]
    %v770 = vld [vmem:[#allocation6 + $0x68] sm:$0xff]
    %v771 = vld [vmem:[#allocation6 + $0x70] sm:$0xff]
    %v772 = vld [vmem:[#allocation6 + $0x78] sm:$0xff]
    %773 = vmatprep.subr.mxu0 0.0
    %774 = vmatpush1.msra.mxu0 %v772
    %775 = vmatprep.subr.mxu0 0.0
    %776 = vmatpush1.msra.mxu0 %v771
    %777 = vmatprep.subr.mxu0 0.0
    %778 = vmatpush1.msra.mxu0 %v770
    %779 = vmatprep.subr.mxu0 0.0
    %780 = vmatpush1.msra.mxu0 %v769
    %781 = vmatprep.subr.mxu0 0.0
    %782 = vmatpush1.msra.mxu0 %v768
    %783 = vmatprep.subr.mxu0 0.0
    %784 = vmatpush1.msra.mxu0 %v767
    %785 = vmatprep.subr.mxu0 0.0
    %786 = vmatpush1.msra.mxu0 %v766
    %787 = vmatprep.subr.mxu0 0.0
    %788 = vmatpush1.msra.mxu0 %v765
    %789 = vmatprep.subr.mxu0 0.0
    %790 = vmatpush1.msra.mxu0 %v764
    %791 = vmatprep.subr.mxu0 0.0
    %792 = vmatpush1.msra.mxu0 %v763
    %793 = vmatprep.subr.mxu0 0.0
    %794 = vmatpush1.msra.mxu0 %v762
    %795 = vmatprep.subr.mxu0 0.0
    %796 = vmatpush1.msra.mxu0 %v761
    %797 = vmatprep.subr.mxu0 0.0
    %798 = vmatpush1.msra.mxu0 %v760
    %799 = vmatprep.subr.mxu0 0.0
    %800 = vmatpush1.msra.mxu0 %v759
    %801 = vmatprep.subr.mxu0 0.0
    %802 = vmatpush1.msra.mxu0 %v758
    %803 = vmatprep.subr.mxu0 0.0
    %804 = vmatpush1.msra.mxu0 %v757
    %805 = vmatprep.subr.mxu0 0.0
    %806 = vmatpush2.msra.mxu0 0.0
    %807 = vmatprep.subr.mxu0 0.0
    %808 = vmatpush2.msra.mxu0 0.0
    %809 = vmatprep.subr.mxu0 0.0
    %810 = vmatpush2.msra.mxu0 0.0
    %811 = vmatprep.subr.mxu0 0.0
    %812 = vmatpush2.msra.mxu0 0.0
    %813 = vmatprep.subr.mxu0 0.0
    %814 = vmatpush2.msra.mxu0 0.0
    %815 = vmatprep.subr.mxu0 0.0
    %816 = vmatpush2.msra.mxu0 0.0
    %817 = vmatprep.subr.mxu0 0.0
    %818 = vmatpush2.msra.mxu0 0.0
    %819 = vmatprep.subr.mxu0 0.0
    %820 = vmatpush2.msra.mxu0 0.0
    %821 = vmatprep.subr.mxu0 0.0
    %822 = vmatpush2.msra.mxu0 0.0
    %823 = vmatprep.subr.mxu0 0.0
    %824 = vmatpush2.msra.mxu0 0.0
    %825 = vmatprep.subr.mxu0 0.0
    %826 = vmatpush2.msra.mxu0 0.0
    %827 = vmatprep.subr.mxu0 0.0
    %828 = vmatpush2.msra.mxu0 0.0
    %829 = vmatprep.subr.mxu0 0.0
    %830 = vmatpush2.msra.mxu0 0.0
    %831 = vmatprep.subr.mxu0 0.0
    %832 = vmatpush2.msra.mxu0 0.0
    %833 = vmatprep.subr.mxu0 0.0
    %834 = vmatpush2.msra.mxu0 0.0
    %835 = vmatprep.subr.mxu0 0.0
    %836 = vmatpush2.msra.mxu0 0.0
    %837 = vmatprep.mubr.f32.mxu0 0.0
    %838 = vmatmul.mubr.f32.gmra.mxu0 %v756
    %v839 = vpop.f32.mrf.mxu0
    %v840 = vadd.f32 0.0, %v839
    %v841 = vpop.f32.mrf.mxu0
    %842 = vdwg.mxu0
    %v843 = vadd.f32 %v755, %v840
    %v844 = vtanh.pop %v843
    %845 = vst [vmem:[#allocation2] sm:$0xff] %v844
    %s846 = scalar_lea.vmem %s4, 48
    %847 = vst [vmem:[%s846] sm:$0xff] %v844
    %s848 = scalar_lea.vmem [#allocation3], 56
    %v849 = vld [vmem:[%s848] sm:$0xff]
    %v850 = vld [vmem:[#allocation2] sm:$0xff]
    %v851 = vld [vmem:[#allocation6] sm:$0xff]
    %v852 = vld [vmem:[#allocation6 + $0x8] sm:$0xff]
    %v853 = vld [vmem:[#allocation6 + $0x10] sm:$0xff]
    %v854 = vld [vmem:[#allocation6 + $0x18] sm:$0xff]
    %v855 = vld [vmem:[#allocation6 + $0x20] sm:$0xff]
    %v856 = vld [vmem:[#allocation6 + $0x28] sm:$0xff]
    %v857 = vld [vmem:[#allocation6 + $0x30] sm:$0xff]
    %v858 = vld [vmem:[#allocation6 + $0x38] sm:$0xff]
    %v859 = vld [vmem:[#allocation6 + $0x40] sm:$0xff]
    %v860 = vld [vmem:[#allocation6 + $0x48] sm:$0xff]
    %v861 = vld [vmem:[#allocation6 + $0x50] sm:$0xff]
    %v862 = vld [vmem:[#allocation6 + $0x58] sm:$0xff]
    %v863 = vld [vmem:[#allocation6 + $0x60] sm:$0xff]
    %v864 = vld [vmem:[#allocation6 + $0x68] sm:$0xff]
    %v865 = vld [vmem:[#allocation6 + $0x70] sm:$0xff]
    %v866 = vld [vmem:[#allocation6 + $0x78] sm:$0xff]
    %867 = vmatprep.subr.mxu0 0.0
    %868 = vmatpush1.msra.mxu0 %v866
    %869 = vmatprep.subr.mxu0 0.0
    %870 = vmatpush1.msra.mxu0 %v865
    %871 = vmatprep.subr.mxu0 0.0
    %872 = vmatpush1.msra.mxu0 %v864
    %873 = vmatprep.subr.mxu0 0.0
    %874 = vmatpush1.msra.mxu0 %v863
    %875 = vmatprep.subr.mxu0 0.0
    %876 = vmatpush1.msra.mxu0 %v862
    %877 = vmatprep.subr.mxu0 0.0
    %878 = vmatpush1.msra.mxu0 %v861
    %879 = vmatprep.subr.mxu0 0.0
    %880 = vmatpush1.msra.mxu0 %v860
    %881 = vmatprep.subr.mxu0 0.0
    %882 = vmatpush1.msra.mxu0 %v859
    %883 = vmatprep.subr.mxu0 0.0
    %884 = vmatpush1.msra.mxu0 %v858
    %885 = vmatprep.subr.mxu0 0.0
    %886 = vmatpush1.msra.mxu0 %v857
    %887 = vmatprep.subr.mxu0 0.0
    %888 = vmatpush1.msra.mxu0 %v856
    %889 = vmatprep.subr.mxu0 0.0
    %890 = vmatpush1.msra.mxu0 %v855
    %891 = vmatprep.subr.mxu0 0.0
    %892 = vmatpush1.msra.mxu0 %v854
    %893 = vmatprep.subr.mxu0 0.0
    %894 = vmatpush1.msra.mxu0 %v853
    %895 = vmatprep.subr.mxu0 0.0
    %896 = vmatpush1.msra.mxu0 %v852
    %897 = vmatprep.subr.mxu0 0.0
    %898 = vmatpush1.msra.mxu0 %v851
    %899 = vmatprep.subr.mxu0 0.0
    %900 = vmatpush2.msra.mxu0 0.0
    %901 = vmatprep.subr.mxu0 0.0
    %902 = vmatpush2.msra.mxu0 0.0
    %903 = vmatprep.subr.mxu0 0.0
    %904 = vmatpush2.msra.mxu0 0.0
    %905 = vmatprep.subr.mxu0 0.0
    %906 = vmatpush2.msra.mxu0 0.0
    %907 = vmatprep.subr.mxu0 0.0
    %908 = vmatpush2.msra.mxu0 0.0
    %909 = vmatprep.subr.mxu0 0.0
    %910 = vmatpush2.msra.mxu0 0.0
    %911 = vmatprep.subr.mxu0 0.0
    %912 = vmatpush2.msra.mxu0 0.0
    %913 = vmatprep.subr.mxu0 0.0
    %914 = vmatpush2.msra.mxu0 0.0
    %915 = vmatprep.subr.mxu0 0.0
    %916 = vmatpush2.msra.mxu0 0.0
    %917 = vmatprep.subr.mxu0 0.0
    %918 = vmatpush2.msra.mxu0 0.0
    %919 = vmatprep.subr.mxu0 0.0
    %920 = vmatpush2.msra.mxu0 0.0
    %921 = vmatprep.subr.mxu0 0.0
    %922 = vmatpush2.msra.mxu0 0.0
    %923 = vmatprep.subr.mxu0 0.0
    %924 = vmatpush2.msra.mxu0 0.0
    %925 = vmatprep.subr.mxu0 0.0
    %926 = vmatpush2.msra.mxu0 0.0
    %927 = vmatprep.subr.mxu0 0.0
    %928 = vmatpush2.msra.mxu0 0.0
    %929 = vmatprep.subr.mxu0 0.0
    %930 = vmatpush2.msra.mxu0 0.0
    %931 = vmatprep.mubr.f32.mxu0 0.0
    %932 = vmatmul.mubr.f32.gmra.mxu0 %v850
    %v933 = vpop.f32.mrf.mxu0
    %v934 = vadd.f32 0.0, %v933
    %v935 = vpop.f32.mrf.mxu0
    %936 = vdwg.mxu0
    %v937 = vadd.f32 %v849, %v934
    %v938 = vtanh.pop %v937
    %939 = vst [vmem:[#allocation2] sm:$0xff] %v938
    %s940 = scalar_lea.vmem %s4, 56
    %941 = vst [vmem:[%s940] sm:$0xff] %v938
    %v942 = vld [vmem:[#allocation2] sm:$0xff]
    %943 = vst [vmem:[%s5] sm:$0xff] %v942
    // Predicated region
    $region26: #{rnn_forward.3} parent=1 // pred_check
      _
    $region27: #{rnn_forward.3} parent=1 // pred_check_branch
      %945 = sbr.rel (0) target = $region29
    $region28: #{rnn_forward.3} parent=1 // pred_region
      _
    $region29: #{rnn_forward.3} parent=1 // pred_fallthru
      _
    // Predicated region
    $region30: #{rnn_forward.3} parent=1 // pred_check
      _
    $region31: #{rnn_forward.3} parent=1 // pred_check_branch
      %947 = sbr.rel (0) target = $region33
    $region32: #{rnn_forward.3} parent=1 // pred_region
      _
    $region33: #{rnn_forward.3} parent=1 // pred_fallthru
      _
    // Predicated region
    $region34: #{rnn_forward.3} parent=1 // pred_check
      _
    $region35: #{rnn_forward.3} parent=1 // pred_check_branch
      %949 = sbr.rel (0) target = $region37
    $region36: #{rnn_forward.3} parent=1 // pred_region
      _
    $region37: #{rnn_forward.3} parent=1 // pred_fallthru
      _
    // Predicated region
    $region38: #{rnn_forward.3} parent=1 // pred_check
      _
    $region39: #{rnn_forward.3} parent=1 // pred_check_branch
      %951 = sbr.rel (0) target = $region41
    $region40: #{rnn_forward.3} parent=1 // pred_region
      _
    $region41: #{rnn_forward.3} parent=1 // pred_fallthru
      _
    %952 = vsyncpa [#allocation5], 1
    %953 = vsyncpa [#allocation7], 1

</llo_original>
